<compile_context>
chip_gen: v7x
topology: tpu7x:2x2x1
jax: 0.10.0
libtpu: 0.0.40
codegen_flags: <defaults>
</compile_context>

<pallas_src>
import math
import jax
import jax.numpy as jnp
from jax import lax
from jax.experimental import pallas as pl
from jax.experimental.pallas import tpu as pltpu

# ---------------- config (small DeiT-like) ----------------
BATCH = 2
SEQ = 8
HIDDEN = 32
NUM_HEADS = 4
HEAD_DIM = HIDDEN // NUM_HEADS


def deit_attention_kernel(
    x_ref,      # (1, S, H)   one batch element of hidden_states
    wqkv_ref,   # (H, 3H)     fused [Wq*scale | Wk | Wv], already (in, out)
    bqkv_ref,   # (1, 3H)     fused [bq*scale | bk | bv]
    wo_ref,     # (H, H)      output dense weight, already (in, out)
    bo_ref,     # (1, H)
    out_ref,    # (1, S, H)
):
    x = x_ref[0]                                                       # (S, H) f32

    # Fused Q/K/V projection: a single MXU matmul (3H-lane output) + bias.
    qkv = jnp.dot(x, wqkv_ref[...],
                  preferred_element_type=jnp.float32) + bqkv_ref[...]  # (S, 3H)

    # (S, H) slab -> (num_heads, S, d); one reshape+transpose per Q/K/V
    # instead of 4 width-8 lane slices per tensor.
    def heads(t):  # (S, H) -> (NH, S, D)
        return jnp.transpose(t.reshape(SEQ, NUM_HEADS, HEAD_DIM), (1, 0, 2))

    q = heads(qkv[:, :HIDDEN])
    k = heads(qkv[:, HIDDEN:2 * HIDDEN])
    v = heads(qkv[:, 2 * HIDDEN:])

    # scores = (Q * 1/sqrt(d)) K^T, batched over heads, contracting d directly
    # (scale pre-folded into Wq/bq on the host; no explicit K transpose).
    scores = lax.dot_general(
        q, k, (((2,), (2,)), ((0,), (0,))),
        preferred_element_type=jnp.float32)                            # (NH, S, S)

    # one numerically-stable softmax over the key axis (exact normalization)
    m = jnp.max(scores, axis=-1, keepdims=True)
    e = jnp.exp(scores - m)
    denom = jnp.sum(e, axis=-1, keepdims=True)
    probs = e / denom                                                  # (NH, S, S)
    # (attention-probs dropout is identity in eval mode; head_mask is None)

    # context = probs @ V, batched over heads
    ctx = lax.dot_general(
        probs, v, (((2,), (1,)), ((0,), (0,))),
        preferred_element_type=jnp.float32)                            # (NH, S, D)

    # merge heads back: (NH, S, D) -> (S, H)
    context = jnp.transpose(ctx, (1, 0, 2)).reshape(SEQ, HIDDEN)

    # DeiTSelfOutput dense projection (dropout identity in eval mode)
    out = jnp.dot(context, wo_ref[...],
                  preferred_element_type=jnp.float32) + bo_ref[...]    # (S, H)

    out_ref[0] = out.astype(out_ref.dtype)


def prepare_params(wq, bq, wk, bk, wv, bv, wo, bo):
    """One-time host-side weight prep (transpose to (in,out), fold the
    1/sqrt(head_dim) attention scale into the query weights, fuse Q/K/V)."""
    scale = 1.0 / math.sqrt(HEAD_DIM)
    wqkv = jnp.concatenate(
        [jnp.transpose(wq) * scale, jnp.transpose(wk), jnp.transpose(wv)],
        axis=1)                                                        # (H, 3H)
    bqkv = jnp.concatenate([bq * scale, bk, bv]).reshape(1, 3 * HIDDEN)  # (1, 3H)
    wo_t = jnp.transpose(wo)                                           # (H, H)
    bo2 = bo.reshape(1, HIDDEN)                                        # (1, H)
    return wqkv, bqkv, wo_t, bo2


def deit_attention(hidden_states, wqkv, bqkv, wo_t, bo2):
    """hidden_states: (B, S, H) float32; prepared params from prepare_params().
    Returns attention_output (B, S, H)."""
    B, S, H = hidden_states.shape
    assert B == BATCH and S == SEQ and H == HIDDEN

    flops = (2 * B * S * H * 3 * H                      # fused QKV projection
             + 2 * 2 * B * NUM_HEADS * S * S * HEAD_DIM  # scores + context
             + 2 * B * S * H * H)                        # output dense
    transcendentals = B * NUM_HEADS * S * S              # exp in softmax
    bytes_accessed = 4 * (2 * B * S * H                  # x in + out
                          + H * 3 * H + 3 * H            # wqkv + bqkv
                          + H * H + H)                   # wo + bo

    return pl.pallas_call(
        deit_attention_kernel,
        out_shape=jax.ShapeDtypeStruct((B, S, H), hidden_states.dtype),
        grid=(B,),
        in_specs=[
            pl.BlockSpec((1, S, H), lambda b: (b, 0, 0)),        # x (per batch)
            pl.BlockSpec((H, 3 * H), lambda b: (0, 0)),          # wqkv (resident)
            pl.BlockSpec((1, 3 * H), lambda b: (0, 0)),          # bqkv
            pl.BlockSpec((H, H), lambda b: (0, 0)),              # wo
            pl.BlockSpec((1, H), lambda b: (0, 0)),              # bo
        ],
        out_specs=pl.BlockSpec((1, S, H), lambda b: (b, 0, 0)),
        compiler_params=pltpu.CompilerParams(
            dimension_semantics=("parallel",)),                  # 2 TCs on v7x
        cost_estimate=pl.CostEstimate(
            flops=flops, transcendentals=transcendentals,
            bytes_accessed=bytes_accessed),
    )(hidden_states, wqkv, bqkv, wo_t, bo2)


# jitted forward: the pallas_call is the only per-step work.
deit_attention_jit = jax.jit(deit_attention)


def reference_deit_attention(x, wq, bq, wk, bk, wv, bv, wo, bo):
    """Pure-JAX reference mirroring the PyTorch forward."""
    B, S, H = x.shape
    d = HEAD_DIM

    def linear(t, w, b):
        return jnp.einsum("bsh,oh->bso", t, w) + b

    def split_heads(t):  # (B, S, H) -> (B, nh, S, d)
        return t.reshape(B, S, NUM_HEADS, d).transpose(0, 2, 1, 3)

    q = split_heads(linear(x, wq, bq))
    k = split_heads(linear(x, wk, bk))
    v = split_heads(linear(x, wv, bv))

    scores = jnp.einsum("bhqd,bhkd->bhqk", q, k) / math.sqrt(d)
    probs = jax.nn.softmax(scores, axis=-1)
    ctx = jnp.einsum("bhqk,bhkd->bhqd", probs, v)
    ctx = ctx.transpose(0, 2, 1, 3).reshape(B, S, H)
    return linear(ctx, wo, bo)


if __name__ == "__main__":
    key = jax.random.PRNGKey(0)
    keys = jax.random.split(key, 9)

    x = jax.random.normal(keys[0], (BATCH, SEQ, HIDDEN), dtype=jnp.float32)

    init = 0.02
    wq = init * jax.random.normal(keys[1], (HIDDEN, HIDDEN), dtype=jnp.float32)
    wk = init * jax.random.normal(keys[2], (HIDDEN, HIDDEN), dtype=jnp.float32)
    wv = init * jax.random.normal(keys[3], (HIDDEN, HIDDEN), dtype=jnp.float32)
    wo = init * jax.random.normal(keys[4], (HIDDEN, HIDDEN), dtype=jnp.float32)
    bq = init * jax.random.normal(keys[5], (HIDDEN,), dtype=jnp.float32)
    bk = init * jax.random.normal(keys[6], (HIDDEN,), dtype=jnp.float32)
    bv = init * jax.random.normal(keys[7], (HIDDEN,), dtype=jnp.float32)
    bo = init * jax.random.normal(keys[8], (HIDDEN,), dtype=jnp.float32)

    # One-time weight prep (hoisted out of the per-call path).
    params = jax.block_until_ready(prepare_params(wq, bq, wk, bk, wv, bv, wo, bo))

    out = deit_attention_jit(x, *params)
    out = jax.block_until_ready(out)

    ref = reference_deit_attention(x, wq, bq, wk, bk, wv, bv, wo, bo)
    assert out.shape == (BATCH, SEQ, HIDDEN)
    assert jnp.allclose(out, ref, atol=1e-4, rtol=1e-4), (
        f"max abs err {jnp.max(jnp.abs(out - ref))}")

    print("KERNEL_OK")
</pallas_src>

<mosaic_0001>
module attributes {stable_mosaic.version = 11 : i64} {
  func.func @deit_attention_kernel(%arg0: i32, %arg1: memref<1x8x32xf32, #tpu.memory_space<vmem>>, %arg2: memref<32x96xf32, #tpu.memory_space<vmem>>, %arg3: memref<1x96xf32, #tpu.memory_space<vmem>>, %arg4: memref<32x32xf32, #tpu.memory_space<vmem>>, %arg5: memref<1x32xf32, #tpu.memory_space<vmem>>, %arg6: memref<1x8x32xf32, #tpu.memory_space<vmem>>) attributes {dimension_semantics = [#tpu.dimension_semantics<parallel>], iteration_bounds = array<i64: 2>, scalar_prefetch = 0 : i64, scratch_operands = 0 : i64, tpu.core_type = #tpu.core_type<tc>, window_params = [{transform_indices = @transform_0, window_bounds = array<i64: 1, 8, 32>}, {pipeline_mode = #tpu.pipeline_mode<synchronous>, transform_indices = @transform_1, window_bounds = array<i64: 32, 96>}, {pipeline_mode = #tpu.pipeline_mode<synchronous>, transform_indices = @transform_2, window_bounds = array<i64: 1, 96>}, {pipeline_mode = #tpu.pipeline_mode<synchronous>, transform_indices = @transform_3, window_bounds = array<i64: 32, 32>}, {pipeline_mode = #tpu.pipeline_mode<synchronous>, transform_indices = @transform_4, window_bounds = array<i64: 1, 32>}, {transform_indices = @transform_5, window_bounds = array<i64: 1, 8, 32>}]} {
    %c0 = arith.constant 0 : index
    %c0_0 = arith.constant 0 : index
    %c0_1 = arith.constant 0 : index
    %0 = vector.load %arg1[%c0, %c0_0, %c0_1] : memref<1x8x32xf32, #tpu.memory_space<vmem>>, vector<1x8x32xf32>
    %1 = vector.shape_cast %0 : vector<1x8x32xf32> to vector<8x32xf32>
    %c0_2 = arith.constant 0 : index
    %c0_3 = arith.constant 0 : index
    %2 = vector.load %arg2[%c0_2, %c0_3] : memref<32x96xf32, #tpu.memory_space<vmem>>, vector<32x96xf32>
    %cst = arith.constant dense<0.000000e+00> : vector<8x96xf32>
    %3 = tpu.matmul %1, %2, %cst {dimension_numbers = #tpu.dot_dimension_numbers<[1], [0], [0], [1], [0, 0, 1, 1], [], []>} : vector<8x32xf32>, vector<32x96xf32>, vector<8x96xf32> -> vector<8x96xf32>
    %c0_4 = arith.constant 0 : index
    %c0_5 = arith.constant 0 : index
    %4 = vector.load %arg3[%c0_4, %c0_5] : memref<1x96xf32, #tpu.memory_space<vmem>>, vector<1x96xf32>
    %5 = vector.broadcast %4 : vector<1x96xf32> to vector<8x96xf32>
    %6 = arith.addf %3, %5 : vector<8x96xf32>
    %7 = vector.extract_strided_slice %6 {offsets = [0, 0], sizes = [8, 32], strides = [1, 1]} : vector<8x96xf32> to vector<8x32xf32>
    %8 = vector.shape_cast %7 : vector<8x32xf32> to vector<8x4x8xf32>
    %9 = tpu.transpose %8, [1, 0, 2] : vector<8x4x8xf32> -> vector<4x8x8xf32>
    %10 = vector.extract_strided_slice %6 {offsets = [0, 32], sizes = [8, 32], strides = [1, 1]} : vector<8x96xf32> to vector<8x32xf32>
    %11 = vector.shape_cast %10 : vector<8x32xf32> to vector<8x4x8xf32>
    %12 = tpu.transpose %11, [1, 0, 2] : vector<8x4x8xf32> -> vector<4x8x8xf32>
    %13 = vector.extract_strided_slice %6 {offsets = [0, 64], sizes = [8, 32], strides = [1, 1]} : vector<8x96xf32> to vector<8x32xf32>
    %14 = vector.shape_cast %13 : vector<8x32xf32> to vector<8x4x8xf32>
    %15 = tpu.transpose %14, [1, 0, 2] : vector<8x4x8xf32> -> vector<4x8x8xf32>
    %cst_6 = arith.constant dense<0.000000e+00> : vector<4x8x8xf32>
    %16 = tpu.matmul %9, %12, %cst_6 {dimension_numbers = #tpu.dot_dimension_numbers<[2], [2], [1], [1], [0, 0, 0, 1, 1, 1], [0], [0]>} : vector<4x8x8xf32>, vector<4x8x8xf32>, vector<4x8x8xf32> -> vector<4x8x8xf32>
    %cst_7 = arith.constant dense<0xFF800000> : vector<4x8xf32>
    %17 = vector.multi_reduction <maximumf>, %16, %cst_7 [2] : vector<4x8x8xf32> to vector<4x8xf32>
    %18 = vector.shape_cast %17 : vector<4x8xf32> to vector<4x8x1xf32>
    %19 = vector.broadcast %18 : vector<4x8x1xf32> to vector<4x8x8xf32>
    %20 = arith.subf %16, %19 : vector<4x8x8xf32>
    %21 = math.exp %20 : vector<4x8x8xf32>
    %cst_8 = arith.constant dense<0.000000e+00> : vector<4x8xf32>
    %22 = vector.multi_reduction <add>, %21, %cst_8 [2] : vector<4x8x8xf32> to vector<4x8xf32>
    %23 = vector.shape_cast %22 : vector<4x8xf32> to vector<4x8x1xf32>
    %24 = vector.broadcast %23 : vector<4x8x1xf32> to vector<4x8x8xf32>
    %25 = arith.divf %21, %24 : vector<4x8x8xf32>
    %cst_9 = arith.constant dense<0.000000e+00> : vector<4x8x8xf32>
    %26 = tpu.matmul %25, %15, %cst_9 {dimension_numbers = #tpu.dot_dimension_numbers<[2], [1], [1], [2], [0, 0, 0, 1, 1, 2], [0], [0]>} : vector<4x8x8xf32>, vector<4x8x8xf32>, vector<4x8x8xf32> -> vector<4x8x8xf32>
    %27 = tpu.transpose %26, [1, 0, 2] : vector<4x8x8xf32> -> vector<8x4x8xf32>
    %28 = vector.shape_cast %27 : vector<8x4x8xf32> to vector<8x32xf32>
    %c0_10 = arith.constant 0 : index
    %c0_11 = arith.constant 0 : index
    %29 = vector.load %arg4[%c0_10, %c0_11] : memref<32x32xf32, #tpu.memory_space<vmem>>, vector<32x32xf32>
    %cst_12 = arith.constant dense<0.000000e+00> : vector<8x32xf32>
    %30 = tpu.matmul %28, %29, %cst_12 {dimension_numbers = #tpu.dot_dimension_numbers<[1], [0], [0], [1], [0, 0, 1, 1], [], []>} : vector<8x32xf32>, vector<32x32xf32>, vector<8x32xf32> -> vector<8x32xf32>
    %c0_13 = arith.constant 0 : index
    %c0_14 = arith.constant 0 : index
    %31 = vector.load %arg5[%c0_13, %c0_14] : memref<1x32xf32, #tpu.memory_space<vmem>>, vector<1x32xf32>
    %32 = vector.broadcast %31 : vector<1x32xf32> to vector<8x32xf32>
    %33 = arith.addf %30, %32 : vector<8x32xf32>
    %c0_15 = arith.constant 0 : index
    %c0_16 = arith.constant 0 : index
    %c0_17 = arith.constant 0 : index
    %34 = vector.load %arg6[%c0_15, %c0_16, %c0_17] : memref<1x8x32xf32, #tpu.memory_space<vmem>>, vector<1x8x32xf32>
    %35 = vector.shape_cast %34 : vector<1x8x32xf32> to vector<8x32xf32>
    %36 = vector.shape_cast %33 : vector<8x32xf32> to vector<1x8x32xf32>
    tpu.vector_store %arg6[%c0_15, %c0_16, %c0_17], %36 {strides = array<i32>} : memref<1x8x32xf32, #tpu.memory_space<vmem>>, vector<1x8x32xf32>,
    return
  }
  func.func @transform_0(%arg0: i32) -> (i32, i32, i32) {
    %c0_i32 = arith.constant 0 : i32
    %c0_i32_0 = arith.constant 0 : i32
    %c0_i32_1 = arith.constant 0 : i32
    return %arg0, %c0_i32, %c0_i32_0 : i32, i32, i32
  }
  func.func @transform_1(%arg0: i32) -> (i32, i32) {
    %c0_i32 = arith.constant 0 : i32
    %c0_i32_0 = arith.constant 0 : i32
    %c0_i32_1 = arith.constant 0 : i32
    return %c0_i32, %c0_i32_0 : i32, i32
  }
  func.func @transform_2(%arg0: i32) -> (i32, i32) {
    %c0_i32 = arith.constant 0 : i32
    %c0_i32_0 = arith.constant 0 : i32
    %c0_i32_1 = arith.constant 0 : i32
    return %c0_i32, %c0_i32_0 : i32, i32
  }
  func.func @transform_3(%arg0: i32) -> (i32, i32) {
    %c0_i32 = arith.constant 0 : i32
    %c0_i32_0 = arith.constant 0 : i32
    %c0_i32_1 = arith.constant 0 : i32
    return %c0_i32, %c0_i32_0 : i32, i32
  }
  func.func @transform_4(%arg0: i32) -> (i32, i32) {
    %c0_i32 = arith.constant 0 : i32
    %c0_i32_0 = arith.constant 0 : i32
    %c0_i32_1 = arith.constant 0 : i32
    return %c0_i32, %c0_i32_0 : i32, i32
  }
  func.func @transform_5(%arg0: i32) -> (i32, i32, i32) {
    %c0_i32 = arith.constant 0 : i32
    %c0_i32_0 = arith.constant 0 : i32
    %c0_i32_1 = arith.constant 0 : i32
    return %arg0, %c0_i32, %c0_i32_0 : i32, i32, i32
  }
}

</mosaic_0001>

<llo_original>
// kernel: deit_attention.1
$region0: #{deit_attention.1}
  #allocation0 [shape = 'u32[]', space=smem, size = 0x4, offset = 0x4, fixed_abs, tag = 'smem constant byte address 0x4 - core index']
  #allocation1 [shape = 'u32[144,128]{1,0:T(1,128)}', space=vmem, size = 0x12000, scoped, tag = 'internal scratch']
  %s0 = inlined_call_operand.hbm [shape: f32[2,8,32], index: 0, kind: input, shape index: {}]
  %s1 = inlined_call_operand.hbm [shape: f32[32,96], index: 1, kind: input, shape index: {}]
  %s2 = inlined_call_operand.vmem [shape: f32[1,96], index: 2, kind: input, shape index: {}]
  %s3 = inlined_call_operand.hbm [shape: f32[32,32], index: 3, kind: input, shape index: {}]
  %s4 = inlined_call_operand.vmem [shape: f32[1,32], index: 4, kind: input, shape index: {}]
  %s5 = inlined_call_operand.hbm [shape: f32[2,8,32], index: 5, kind: output, shape index: {}]
  %s6 = sld [smem:[#allocation0]]
  $region65: #{deit_attention.1} parent=0
    _
  %s8 = ssub.s32 1, %s6
  %s9 = scalar_select 0, %s8, %s6
  $region1: #{deit_attention.1} parent=0
    #allocation2 [shape = 'u8[8192]{0}', space=vmem, size = 0x2000, scoped, tag = 'input window, operand 0']
    #allocation3 [shape = 's32[2]{0}', space=sflag, size = 0x8, scoped, tag = 'scoped memory for deit_attention.1']
    #allocation4 [shape = 's32[2]{0}', space=sflag, size = 0x8, scoped, tag = 'scoped memory for deit_attention.1']
    #allocation5 [shape = 'u8[16384]{0}', space=vmem, size = 0x4000, scoped, tag = 'input window, operand 1, single buffered']
    #allocation6 [shape = 's32[1]{0}', space=sflag, size = 0x4, scoped, tag = 'scoped memory for deit_attention.1']
    #allocation7 [shape = 'u8[16384]{0}', space=vmem, size = 0x4000, scoped, tag = 'input window, operand 3, single buffered']
    #allocation8 [shape = 'u8[8192]{0}', space=vmem, size = 0x2000, scoped, tag = 'output window, operand 0']
    %10 = vsyncpa [#allocation3], 0
    %s11 = scalar_lea.sflag [#allocation3], 1
    %12 = vsyncpa %s11, 0
    %13 = vsyncpa [#allocation6], 0
    %14 = vsyncpa [#allocation4], 0
    %s15 = scalar_lea.sflag [#allocation4], 1
    %16 = vsyncpa %s15, 0
    loop: start=0, step=1, limit=4
    $region2: #{deit_attention.1} parent=1 // loop_pre_header
      _
    $region3: #{deit_attention.1} parent=1 // loop_header
      %s18 = sphi 0, %s22
      %p19 = scmp.ge.s32.totalorder %s18, 4
      %s28 = sphi 0, %s30
      %s31 = sphi 0, %s28
      %s32 = sphi 0, %s31
      %s48 = sphi 0, %s32
      %s52 = sphi 0, %s52
      %s54 = sphi 0, %s52
      %s55 = sphi 0, %s54
      %s69 = sphi 0, %s55
      %s73 = sphi 0, %s73
      %s75 = sphi 0, %s73
      %s76 = sphi 0, %s75
      %s90 = sphi 0, %s76
      %s94 = sphi 0, %s94
      %s96 = sphi 0, %s94
      %s97 = sphi 0, %s96
      %s111 = sphi 0, %s97
      %s115 = sphi 0, %s115
      %s117 = sphi 0, %s115
      %s118 = sphi 0, %s117
      %s132 = sphi 0, %s118
      %s138 = sphi 0, %s140
      %s141 = sphi 0, %s138
      %s142 = sphi 0, %s141
      %s158 = sphi 0, %s142
    $region4: #{deit_attention.1} parent=1 // loop_header_branch
      %21 = sbr.rel (%p19) target = $region8
    $region5: #{deit_attention.1} parent=1 // loop_body
      %s23 = ssub.s32 %s18, 1
      %s24 = ssub.s32 %s18, 2
      %s25 = sadd.s32 %s18, 1
      %s26 = ssub.s32 %s18, %s25
      %p27 = scmp.eq.s32.totalorder %s26, 0
      %s29 = sadd.s32 %s28, 1
      %s30 = scalar_select %p27, %s28, %s29
      %p33 = pneg %p27
      %p34 = scmp.eq.s32.totalorder %s18, 1
      %p35 = por %p33, %p34
      %p36 = scmp.ne.s32.totalorder %s28, %s31
      %p37 = scmp.eq.s32.totalorder %s18, 0
      %p38 = por %p36, %p37
      %p39 = scmp.ne.s32.totalorder %s28, %s31
      %p40 = scmp.eq.s32.totalorder %s23, 1
      %p41 = por %p39, %p40
      %p42 = scmp.ne.s32.totalorder %s31, %s32
      %p43 = scmp.eq.s32.totalorder %s23, 0
      %p44 = por %p42, %p43
      %p45 = scmp.ne.s32.totalorder %s31, %s32
      %p46 = scmp.eq.s32.totalorder %s24, 1
      %p47 = por %p45, %p46
      %p49 = scmp.ne.s32.totalorder %s32, %s48
      %p50 = scmp.eq.s32.totalorder %s24, 0
      %p51 = por %p49, %p50
      %s53 = sadd.s32 %s52, 1
      %p56 = scmp.eq.s32.totalorder %s18, 1
      %p57 = scmp.ne.s32.totalorder %s52, %s54
      %p58 = scmp.eq.s32.totalorder %s18, 0
      %p59 = por %p57, %p58
      %p60 = scmp.ne.s32.totalorder %s52, %s54
      %p61 = scmp.eq.s32.totalorder %s23, 1
      %p62 = por %p60, %p61
      %p63 = scmp.ne.s32.totalorder %s54, %s55
      %p64 = scmp.eq.s32.totalorder %s23, 0
      %p65 = por %p63, %p64
      %p66 = scmp.ne.s32.totalorder %s54, %s55
      %p67 = scmp.eq.s32.totalorder %s24, 1
      %p68 = por %p66, %p67
      %p70 = scmp.ne.s32.totalorder %s55, %s69
      %p71 = scmp.eq.s32.totalorder %s24, 0
      %p72 = por %p70, %p71
      %s74 = sadd.s32 %s73, 1
      %p77 = scmp.eq.s32.totalorder %s18, 1
      %p78 = scmp.ne.s32.totalorder %s73, %s75
      %p79 = scmp.eq.s32.totalorder %s18, 0
      %p80 = por %p78, %p79
      %p81 = scmp.ne.s32.totalorder %s73, %s75
      %p82 = scmp.eq.s32.totalorder %s23, 1
      %p83 = por %p81, %p82
      %p84 = scmp.ne.s32.totalorder %s75, %s76
      %p85 = scmp.eq.s32.totalorder %s23, 0
      %p86 = por %p84, %p85
      %p87 = scmp.ne.s32.totalorder %s75, %s76
      %p88 = scmp.eq.s32.totalorder %s24, 1
      %p89 = por %p87, %p88
      %p91 = scmp.ne.s32.totalorder %s76, %s90
      %p92 = scmp.eq.s32.totalorder %s24, 0
      %p93 = por %p91, %p92
      %s95 = sadd.s32 %s94, 1
      %p98 = scmp.eq.s32.totalorder %s18, 1
      %p99 = scmp.ne.s32.totalorder %s94, %s96
      %p100 = scmp.eq.s32.totalorder %s18, 0
      %p101 = por %p99, %p100
      %p102 = scmp.ne.s32.totalorder %s94, %s96
      %p103 = scmp.eq.s32.totalorder %s23, 1
      %p104 = por %p102, %p103
      %p105 = scmp.ne.s32.totalorder %s96, %s97
      %p106 = scmp.eq.s32.totalorder %s23, 0
      %p107 = por %p105, %p106
      %p108 = scmp.ne.s32.totalorder %s96, %s97
      %p109 = scmp.eq.s32.totalorder %s24, 1
      %p110 = por %p108, %p109
      %p112 = scmp.ne.s32.totalorder %s97, %s111
      %p113 = scmp.eq.s32.totalorder %s24, 0
      %p114 = por %p112, %p113
      %s116 = sadd.s32 %s115, 1
      %p119 = scmp.eq.s32.totalorder %s18, 1
      %p120 = scmp.ne.s32.totalorder %s115, %s117
      %p121 = scmp.eq.s32.totalorder %s18, 0
      %p122 = por %p120, %p121
      %p123 = scmp.ne.s32.totalorder %s115, %s117
      %p124 = scmp.eq.s32.totalorder %s23, 1
      %p125 = por %p123, %p124
      %p126 = scmp.ne.s32.totalorder %s117, %s118
      %p127 = scmp.eq.s32.totalorder %s23, 0
      %p128 = por %p126, %p127
      %p129 = scmp.ne.s32.totalorder %s117, %s118
      %p130 = scmp.eq.s32.totalorder %s24, 1
      %p131 = por %p129, %p130
      %p133 = scmp.ne.s32.totalorder %s118, %s132
      %p134 = scmp.eq.s32.totalorder %s24, 0
      %p135 = por %p133, %p134
      %s136 = ssub.s32 %s18, %s25
      %p137 = scmp.eq.s32.totalorder %s136, 0
      %s139 = sadd.s32 %s138, 1
      %s140 = scalar_select %p137, %s138, %s139
      %p143 = pneg %p137
      %p144 = scmp.eq.s32.totalorder %s18, 1
      %p145 = por %p143, %p144
      %p146 = scmp.ne.s32.totalorder %s138, %s141
      %p147 = scmp.eq.s32.totalorder %s18, 0
      %p148 = por %p146, %p147
      %p149 = scmp.ne.s32.totalorder %s138, %s141
      %p150 = scmp.eq.s32.totalorder %s23, 1
      %p151 = por %p149, %p150
      %p152 = scmp.ne.s32.totalorder %s141, %s142
      %p153 = scmp.eq.s32.totalorder %s23, 0
      %p154 = por %p152, %p153
      %p155 = scmp.ne.s32.totalorder %s141, %s142
      %p156 = scmp.eq.s32.totalorder %s24, 1
      %p157 = por %p155, %p156
      %p159 = scmp.ne.s32.totalorder %s142, %s158
      %p160 = scmp.eq.s32.totalorder %s24, 0
      %p161 = por %p159, %p160
      %p162 = scmp.le.s32.totalorder 1, %s18
      %p163 = scmp.lt.s32.totalorder %s18, 3
      %p164 = pnand %p162, %p163
      %p165 = pneg %p164
      // Predicated region
      $region9: #{deit_attention.1} parent=5 // pred_check
        _
      $region10: #{deit_attention.1} parent=5 // pred_check_branch
        %167 = sbr.rel (%p164) target = $region12
      $region11: #{deit_attention.1} parent=5 // pred_region
        %s168 = ssub.s32 %s18, 1
        // Predicated region
        $region13: #{deit_attention.1} parent=11 // pred_check
          %p169 = pneg %p65
        $region14: #{deit_attention.1} parent=11 // pred_check_branch
          %171 = sbr.rel (%p169) target = $region16
        $region15: #{deit_attention.1} parent=11 // pred_region
          %s173 = ssub.s32 512, 512
          %174 = vsyncadd [#allocation6], %s173
          %s175 = sshll.u32 [#allocation5], 4
          %s176 = int_to_ptr.vmem [resolvable:$true] %s175
          %181 = dma.hbm_to_vmem [thread:$0]  %s1, 512, %s176, [#allocation6], 128, 128, 8
        $region16: #{deit_attention.1} parent=11 // pred_fallthru
          _
        // Predicated region
        $region17: #{deit_attention.1} parent=11 // pred_check
          %p182 = pneg %p86
        $region18: #{deit_attention.1} parent=11 // pred_check_branch
          %184 = sbr.rel (%p182) target = $region20
        $region19: #{deit_attention.1} parent=11 // pred_region
          _
        $region20: #{deit_attention.1} parent=11 // pred_fallthru
          _
        // Predicated region
        $region21: #{deit_attention.1} parent=11 // pred_check
          %p185 = pneg %p107
        $region22: #{deit_attention.1} parent=11 // pred_check_branch
          %187 = sbr.rel (%p185) target = $region24
        $region23: #{deit_attention.1} parent=11 // pred_region
          %s189 = ssub.s32 512, 512
          %190 = vsyncadd [#allocation6], %s189
          %s191 = sshll.u32 [#allocation7], 4
          %s192 = int_to_ptr.vmem [resolvable:$true] %s191
          %197 = dma.hbm_to_vmem [thread:$0]  %s3, 512, %s192, [#allocation6], 128, 128, 8
        $region24: #{deit_attention.1} parent=11 // pred_fallthru
          _
        // Predicated region
        $region25: #{deit_attention.1} parent=11 // pred_check
          %p198 = pneg %p128
        $region26: #{deit_attention.1} parent=11 // pred_check_branch
          %200 = sbr.rel (%p198) target = $region28
        $region27: #{deit_attention.1} parent=11 // pred_region
          _
        $region28: #{deit_attention.1} parent=11 // pred_fallthru
          _
      $region12: #{deit_attention.1} parent=5 // pred_fallthru
        _
      %p201 = scmp.lt.s32.totalorder %s18, 2
      // Predicated region
      $region29: #{deit_attention.1} parent=5 // pred_check
        %p202 = pneg %p201
      $region30: #{deit_attention.1} parent=5 // pred_check_branch
        %204 = sbr.rel (%p202) target = $region32
      $region31: #{deit_attention.1} parent=5 // pred_region
        // Predicated region
        $region33: #{deit_attention.1} parent=31 // pred_check
          %p205 = pneg %p38
        $region34: #{deit_attention.1} parent=31 // pred_check_branch
          %207 = sbr.rel (%p205) target = $region36
        $region35: #{deit_attention.1} parent=31 // pred_region
          %s208 = sand.u32 %s28, 1
          %s209 = scalar_lea.sflag [#allocation3], %s208
          %s210 = sand.u32 %s28, 1
          %s211 = smul.addr %s210, 8
          %s212 = scalar_lea.vmem [#allocation2], %s211
          %s214 = ssub.s32 128, 128
          %215 = vsyncadd %s209, %s214
          %s216 = smul.addr %s18, 128
          %s217 = scalar_lea.hbm %s0, %s216
          %s219 = sshll.u32 %s212, 4
          %s220 = int_to_ptr.vmem [resolvable:$true] %s219
          %222 = dma.hbm_to_vmem [thread:$0]  %s217, 128, %s220, %s209
        $region36: #{deit_attention.1} parent=31 // pred_fallthru
          _
      $region32: #{deit_attention.1} parent=5 // pred_fallthru
        _
      %p223 = scmp.le.s32.totalorder 1, %s18
      %p224 = scmp.lt.s32.totalorder %s18, 3
      %p225 = pnand %p223, %p224
      %p226 = pneg %p225
      // Predicated region
      $region37: #{deit_attention.1} parent=5 // pred_check
        _
      $region38: #{deit_attention.1} parent=5 // pred_check_branch
        %228 = sbr.rel (%p225) target = $region40
      $region39: #{deit_attention.1} parent=5 // pred_region
        %s229 = ssub.s32 %s18, 1
        %s230 = sand.u32 %s31, 1
        %s231 = scalar_lea.sflag [#allocation3], %s230
        %s232 = sand.u32 %s31, 1
        %s233 = smul.addr %s232, 8
        %s234 = scalar_lea.vmem [#allocation2], %s233
        // Predicated region
        $region41: #{deit_attention.1} parent=39 // pred_check
          %p235 = pneg %p44
        $region42: #{deit_attention.1} parent=39 // pred_check_branch
          %237 = sbr.rel (%p235) target = $region44
        $region43: #{deit_attention.1} parent=39 // pred_region
          %238 = dma.done %s231, 128
        $region44: #{deit_attention.1} parent=39 // pred_fallthru
          _
        // Predicated region
        $region45: #{deit_attention.1} parent=39 // pred_check
          %p239 = pneg %p65
        $region46: #{deit_attention.1} parent=39 // pred_check_branch
          %241 = sbr.rel (%p239) target = $region48
        $region47: #{deit_attention.1} parent=39 // pred_region
          %242 = dma.done [#allocation6], 512
        $region48: #{deit_attention.1} parent=39 // pred_fallthru
          _
        // Predicated region
        $region49: #{deit_attention.1} parent=39 // pred_check
          %p243 = pneg %p107
        $region50: #{deit_attention.1} parent=39 // pred_check_branch
          %245 = sbr.rel (%p243) target = $region52
        $region51: #{deit_attention.1} parent=39 // pred_region
          %246 = dma.done [#allocation6], 512
        $region52: #{deit_attention.1} parent=39 // pred_fallthru
          _
        %s247 = sand.u32 %s31, 1
        %s248 = scalar_lea.sflag [#allocation3], %s247
        %s249 = sand.u32 %s31, 1
        %s250 = smul.addr %s249, 8
        %s251 = scalar_lea.vmem [#allocation2], %s250
        %p252 = pneg %p44
        %p253 = pneg %p41
        %p254 = pneg %p65
        %p255 = pneg %p62
        %p256 = pneg %p86
        %p257 = pneg %p83
        %p258 = pneg %p107
        %p259 = pneg %p104
        %p260 = pneg %p128
        %p261 = pneg %p125
        %p262 = pneg %p154
        %p263 = pneg %p151
        %s264 = sand.u32 %s141, 1
        %s265 = scalar_lea.sflag [#allocation4], %s264
        %s266 = sand.u32 %s141, 1
        %s267 = smul.addr %s266, 8
        %s268 = scalar_lea.vmem [#allocation8], %s267
        %v269 = vld [vmem:[%s234] sm:$0xff]
        %v270 = vld [vmem:[#allocation5] sm:$0xff]
        %v271 = vld [vmem:[#allocation5 + $0x8] sm:$0xff]
        %v272 = vld [vmem:[#allocation5 + $0x10] sm:$0xff]
        %v273 = vld [vmem:[#allocation5 + $0x18] sm:$0xff]
        %v274 = vld [vmem:[%s2] sm:$0x1]
        %v276 = vlaneseq
        %v277 = vshrl.u32 %v276, 7
        %v278 = vsub.s32 0, %v277
        %v279 = vrot.slane %v274, %v278
        %vm281 = vcmask 261120
        %v283 = vsel %vm281, %v269, 0
        %285 = vmatprep.subr.mxu0 0.0
        %286 = vmatpush1.msra.mxu0 %v270
        %287 = vmatprep.subr.mxu0 0.0
        %288 = vmatpush1.msra.mxu0 %v271
        %289 = vmatprep.subr.mxu0 0.0
        %290 = vmatpush1.msra.mxu0 %v272
        %291 = vmatprep.subr.mxu0 0.0
        %292 = vmatpush1.msra.mxu0 %v273
        %293 = vmatprep.subr.mxu0 0.0
        %294 = vmatpush1.msra.mxu0 0.0
        %295 = vmatprep.subr.mxu0 0.0
        %296 = vmatpush1.msra.mxu0 0.0
        %297 = vmatprep.subr.mxu0 0.0
        %298 = vmatpush1.msra.mxu0 0.0
        %299 = vmatprep.subr.mxu0 0.0
        %300 = vmatpush1.msra.mxu0 0.0
        %301 = vmatprep.subr.mxu0 0.0
        %302 = vmatpush1.msra.mxu0 0.0
        %303 = vmatprep.subr.mxu0 0.0
        %304 = vmatpush1.msra.mxu0 0.0
        %305 = vmatprep.subr.mxu0 0.0
        %306 = vmatpush1.msra.mxu0 0.0
        %307 = vmatprep.subr.mxu0 0.0
        %308 = vmatpush1.msra.mxu0 0.0
        %309 = vmatprep.subr.mxu0 0.0
        %310 = vmatpush1.msra.mxu0 0.0
        %311 = vmatprep.subr.mxu0 0.0
        %312 = vmatpush1.msra.mxu0 0.0
        %313 = vmatprep.subr.mxu0 0.0
        %314 = vmatpush1.msra.mxu0 0.0
        %315 = vmatprep.subr.mxu0 0.0
        %316 = vmatpush1.msra.mxu0 0.0
        %317 = vmatprep.subr.mxu0 0.0
        %318 = vmatpush1.msra.mxu0 0.0
        %319 = vmatprep.subr.mxu0 0.0
        %320 = vmatpush1.msra.mxu0 0.0
        %321 = vmatprep.subr.mxu0 0.0
        %322 = vmatpush1.msra.mxu0 0.0
        %323 = vmatprep.subr.mxu0 0.0
        %324 = vmatpush1.msra.mxu0 0.0
        %325 = vmatprep.subr.mxu0 0.0
        %326 = vmatpush1.msra.mxu0 0.0
        %327 = vmatprep.subr.mxu0 0.0
        %328 = vmatpush1.msra.mxu0 0.0
        %329 = vmatprep.subr.mxu0 0.0
        %330 = vmatpush1.msra.mxu0 0.0
        %331 = vmatprep.subr.mxu0 0.0
        %332 = vmatpush1.msra.mxu0 0.0
        %333 = vmatprep.subr.mxu0 0.0
        %334 = vmatpush1.msra.mxu0 0.0
        %335 = vmatprep.subr.mxu0 0.0
        %336 = vmatpush1.msra.mxu0 0.0
        %337 = vmatprep.subr.mxu0 0.0
        %338 = vmatpush1.msra.mxu0 0.0
        %339 = vmatprep.subr.mxu0 0.0
        %340 = vmatpush1.msra.mxu0 0.0
        %341 = vmatprep.subr.mxu0 0.0
        %342 = vmatpush1.msra.mxu0 0.0
        %343 = vmatprep.subr.mxu0 0.0
        %344 = vmatpush1.msra.mxu0 0.0
        %345 = vmatprep.subr.mxu0 0.0
        %346 = vmatpush1.msra.mxu0 0.0
        %347 = vmatprep.subr.mxu0 0.0
        %348 = vmatpush1.msra.mxu0 0.0
        %349 = vmatprep.mubr.f32.mxu0 0.0
        %350 = vmatmul.mubr.f32.gmra.mrb[0].mxu0 %v283
        %v351 = vpop.f32.mrb[0].mxu0
        %v352 = vadd.f32 %v279, %v351
        %v353 = vpop.f32.mrb[0].mxu0
        %354 = vdwg.mxu0
        %356 = vrot.lane.b32.xlu0 %v352, 120
        %v357 = vpop.permute.xlu0 %356
        %359 = vrot.lane.b32.xlu0 %v352, 112
        %v360 = vpop.permute.xlu0 %359
        %362 = vrot.lane.b32.xlu0 %v352, 104
        %v363 = vpop.permute.xlu0 %362
        %v365 = vcombine.low %v352, %v360
        %v366 = vcombine.high %v352, %v360
        %v368 = vunpack.c.l.s4 1983009808
        %v369 = vunpack.c.0.s8 %v368
        %v370 = vlaneseq
        %v371 = vshrl.u32 %v370, 7
        %v372 = vsub.s32 %v369, %v371
        %v373 = vrot.slane %v365, %v372
        %v375 = vunpack.c.l.s4 1983009808
        %v376 = vunpack.c.0.s8 %v375
        %v377 = vlaneseq
        %v378 = vshrl.u32 %v377, 7
        %v379 = vsub.s32 %v376, %v378
        %v380 = vrot.slane %v366, %v379
        %v381 = vcombine.low %v357, %v363
        %v382 = vcombine.high %v357, %v363
        %v384 = vunpack.c.l.s4 1983009808
        %v385 = vunpack.c.0.s8 %v384
        %v386 = vlaneseq
        %v387 = vshrl.u32 %v386, 7
        %v388 = vsub.s32 %v385, %v387
        %v389 = vrot.slane %v381, %v388
        %v391 = vunpack.c.l.s4 1983009808
        %v392 = vunpack.c.0.s8 %v391
        %v393 = vlaneseq
        %v394 = vshrl.u32 %v393, 7
        %v395 = vsub.s32 %v392, %v394
        %v396 = vrot.slane %v382, %v395
        %v397 = vcombine.low %v373, %v389
        %v398 = vcombine.high %v373, %v389
        %v400 = vunpack.c.l.s4 1934713408
        %v401 = vunpack.c.0.s8 %v400
        %v402 = vlaneseq
        %v403 = vshrl.u32 %v402, 7
        %v404 = vsub.s32 %v401, %v403
        %v405 = vrot.slane %v397, %v404
        %v407 = vunpack.c.l.s4 1934713408
        %v408 = vunpack.c.0.s8 %v407
        %v409 = vlaneseq
        %v410 = vshrl.u32 %v409, 7
        %v411 = vsub.s32 %v408, %v410
        %v412 = vrot.slane %v398, %v411
        %v413 = vcombine.low %v380, %v396
        %v414 = vcombine.high %v380, %v396
        %v416 = vunpack.c.l.s4 1934713408
        %v417 = vunpack.c.0.s8 %v416
        %v418 = vlaneseq
        %v419 = vshrl.u32 %v418, 7
        %v420 = vsub.s32 %v417, %v419
        %v421 = vrot.slane %v413, %v420
        %v423 = vunpack.c.l.s4 1934713408
        %v424 = vunpack.c.0.s8 %v423
        %v425 = vlaneseq
        %v426 = vshrl.u32 %v425, 7
        %v427 = vsub.s32 %v424, %v426
        %v428 = vrot.slane %v414, %v427
        %v429 = vcombine.high %v405, 0.0
        %v430 = vcombine.high %v412, 0.0
        %v431 = vcombine.high %v421, 0.0
        %v432 = vcombine.high %v428, 0.0
        %v433 = vcombine.low %v405, %v412
        %v435 = vunpack.c.l.s4 1983009808
        %v436 = vunpack.c.0.s8 %v435
        %v437 = vlaneseq
        %v438 = vshrl.u32 %v437, 7
        %v439 = vsub.s32 %v436, %v438
        %v440 = vrot.slane %v433, %v439
        %v441 = vcombine.low %v429, %v430
        %v443 = vunpack.c.l.s4 1983009808
        %v444 = vunpack.c.0.s8 %v443
        %v445 = vlaneseq
        %v446 = vshrl.u32 %v445, 7
        %v447 = vsub.s32 %v444, %v446
        %v448 = vrot.slane %v441, %v447
        %v449 = vcombine.low %v421, %v428
        %v451 = vunpack.c.l.s4 1983009808
        %v452 = vunpack.c.0.s8 %v451
        %v453 = vlaneseq
        %v454 = vshrl.u32 %v453, 7
        %v455 = vsub.s32 %v452, %v454
        %v456 = vrot.slane %v449, %v455
        %v457 = vcombine.low %v431, %v432
        %v459 = vunpack.c.l.s4 1983009808
        %v460 = vunpack.c.0.s8 %v459
        %v461 = vlaneseq
        %v462 = vshrl.u32 %v461, 7
        %v463 = vsub.s32 %v460, %v462
        %v464 = vrot.slane %v457, %v463
        %v465 = vcombine.low %v440, %v448
        %v466 = vcombine.high %v440, %v448
        %v468 = vunpack.c.l.s4 1934713408
        %v469 = vunpack.c.0.s8 %v468
        %v470 = vlaneseq
        %v471 = vshrl.u32 %v470, 7
        %v472 = vsub.s32 %v469, %v471
        %v473 = vrot.slane %v465, %v472
        %v475 = vunpack.c.l.s4 1934713408
        %v476 = vunpack.c.0.s8 %v475
        %v477 = vlaneseq
        %v478 = vshrl.u32 %v477, 7
        %v479 = vsub.s32 %v476, %v478
        %v480 = vrot.slane %v466, %v479
        %v481 = vcombine.low %v456, %v464
        %v482 = vcombine.high %v456, %v464
        %v484 = vunpack.c.l.s4 1934713408
        %v485 = vunpack.c.0.s8 %v484
        %v486 = vlaneseq
        %v487 = vshrl.u32 %v486, 7
        %v488 = vsub.s32 %v485, %v487
        %v489 = vrot.slane %v481, %v488
        %v491 = vunpack.c.l.s4 1934713408
        %v492 = vunpack.c.0.s8 %v491
        %v493 = vlaneseq
        %v494 = vshrl.u32 %v493, 7
        %v495 = vsub.s32 %v492, %v494
        %v496 = vrot.slane %v482, %v495
        %v497 = vcombine.low %v473, %v489
        %v498 = vcombine.high %v473, %v489
        %v499 = vcombine.low %v480, %v496
        %v500 = vcombine.high %v480, %v496
        %501 = vrot.lane.b32.xlu0 %v352, 96
        %v502 = vpop.permute.xlu0 %501
        %503 = vrot.lane.b32.xlu0 %v357, 96
        %v504 = vpop.permute.xlu0 %503
        %505 = vrot.lane.b32.xlu0 %v360, 96
        %v506 = vpop.permute.xlu0 %505
        %507 = vrot.lane.b32.xlu0 %v363, 96
        %v508 = vpop.permute.xlu0 %507
        %v513 = vcombine.low %v502, %v506
        %v514 = vcombine.high %v502, %v506
        %v516 = vunpack.c.l.s4 1983009808
        %v517 = vunpack.c.0.s8 %v516
        %v518 = vlaneseq
        %v519 = vshrl.u32 %v518, 7
        %v520 = vsub.s32 %v517, %v519
        %v521 = vrot.slane %v513, %v520
        %v523 = vunpack.c.l.s4 1983009808
        %v524 = vunpack.c.0.s8 %v523
        %v525 = vlaneseq
        %v526 = vshrl.u32 %v525, 7
        %v527 = vsub.s32 %v524, %v526
        %v528 = vrot.slane %v514, %v527
        %v529 = vcombine.low %v504, %v508
        %v530 = vcombine.high %v504, %v508
        %v532 = vunpack.c.l.s4 1983009808
        %v533 = vunpack.c.0.s8 %v532
        %v534 = vlaneseq
        %v535 = vshrl.u32 %v534, 7
        %v536 = vsub.s32 %v533, %v535
        %v537 = vrot.slane %v529, %v536
        %v539 = vunpack.c.l.s4 1983009808
        %v540 = vunpack.c.0.s8 %v539
        %v541 = vlaneseq
        %v542 = vshrl.u32 %v541, 7
        %v543 = vsub.s32 %v540, %v542
        %v544 = vrot.slane %v530, %v543
        %v545 = vcombine.low %v521, %v537
        %v546 = vcombine.high %v521, %v537
        %v548 = vunpack.c.l.s4 1934713408
        %v549 = vunpack.c.0.s8 %v548
        %v550 = vlaneseq
        %v551 = vshrl.u32 %v550, 7
        %v552 = vsub.s32 %v549, %v551
        %v553 = vrot.slane %v545, %v552
        %v555 = vunpack.c.l.s4 1934713408
        %v556 = vunpack.c.0.s8 %v555
        %v557 = vlaneseq
        %v558 = vshrl.u32 %v557, 7
        %v559 = vsub.s32 %v556, %v558
        %v560 = vrot.slane %v546, %v559
        %v561 = vcombine.low %v528, %v544
        %v562 = vcombine.high %v528, %v544
        %v564 = vunpack.c.l.s4 1934713408
        %v565 = vunpack.c.0.s8 %v564
        %v566 = vlaneseq
        %v567 = vshrl.u32 %v566, 7
        %v568 = vsub.s32 %v565, %v567
        %v569 = vrot.slane %v561, %v568
        %v571 = vunpack.c.l.s4 1934713408
        %v572 = vunpack.c.0.s8 %v571
        %v573 = vlaneseq
        %v574 = vshrl.u32 %v573, 7
        %v575 = vsub.s32 %v572, %v574
        %v576 = vrot.slane %v562, %v575
        %v577 = vcombine.high %v553, 0.0
        %v578 = vcombine.high %v560, 0.0
        %v579 = vcombine.high %v569, 0.0
        %v580 = vcombine.high %v576, 0.0
        %v581 = vcombine.low %v553, %v560
        %v583 = vunpack.c.l.s4 1983009808
        %v584 = vunpack.c.0.s8 %v583
        %v585 = vlaneseq
        %v586 = vshrl.u32 %v585, 7
        %v587 = vsub.s32 %v584, %v586
        %v588 = vrot.slane %v581, %v587
        %v589 = vcombine.low %v577, %v578
        %v591 = vunpack.c.l.s4 1983009808
        %v592 = vunpack.c.0.s8 %v591
        %v593 = vlaneseq
        %v594 = vshrl.u32 %v593, 7
        %v595 = vsub.s32 %v592, %v594
        %v596 = vrot.slane %v589, %v595
        %v597 = vcombine.low %v569, %v576
        %v599 = vunpack.c.l.s4 1983009808
        %v600 = vunpack.c.0.s8 %v599
        %v601 = vlaneseq
        %v602 = vshrl.u32 %v601, 7
        %v603 = vsub.s32 %v600, %v602
        %v604 = vrot.slane %v597, %v603
        %v605 = vcombine.low %v579, %v580
        %v607 = vunpack.c.l.s4 1983009808
        %v608 = vunpack.c.0.s8 %v607
        %v609 = vlaneseq
        %v610 = vshrl.u32 %v609, 7
        %v611 = vsub.s32 %v608, %v610
        %v612 = vrot.slane %v605, %v611
        %v613 = vcombine.low %v588, %v596
        %v614 = vcombine.high %v588, %v596
        %v616 = vunpack.c.l.s4 1934713408
        %v617 = vunpack.c.0.s8 %v616
        %v618 = vlaneseq
        %v619 = vshrl.u32 %v618, 7
        %v620 = vsub.s32 %v617, %v619
        %v621 = vrot.slane %v613, %v620
        %v623 = vunpack.c.l.s4 1934713408
        %v624 = vunpack.c.0.s8 %v623
        %v625 = vlaneseq
        %v626 = vshrl.u32 %v625, 7
        %v627 = vsub.s32 %v624, %v626
        %v628 = vrot.slane %v614, %v627
        %v629 = vcombine.low %v604, %v612
        %v630 = vcombine.high %v604, %v612
        %v632 = vunpack.c.l.s4 1934713408
        %v633 = vunpack.c.0.s8 %v632
        %v634 = vlaneseq
        %v635 = vshrl.u32 %v634, 7
        %v636 = vsub.s32 %v633, %v635
        %v637 = vrot.slane %v629, %v636
        %v639 = vunpack.c.l.s4 1934713408
        %v640 = vunpack.c.0.s8 %v639
        %v641 = vlaneseq
        %v642 = vshrl.u32 %v641, 7
        %v643 = vsub.s32 %v640, %v642
        %v644 = vrot.slane %v630, %v643
        %v645 = vcombine.low %v621, %v637
        %v646 = vcombine.high %v621, %v637
        %v647 = vcombine.low %v628, %v644
        %v648 = vcombine.high %v628, %v644
        %649 = vrot.lane.b32.xlu0 %v352, 64
        %v650 = vpop.permute.xlu0 %649
        %651 = vrot.lane.b32.xlu0 %v357, 64
        %v652 = vpop.permute.xlu0 %651
        %653 = vrot.lane.b32.xlu0 %v360, 64
        %v654 = vpop.permute.xlu0 %653
        %655 = vrot.lane.b32.xlu0 %v363, 64
        %v656 = vpop.permute.xlu0 %655
        %v661 = vcombine.low %v650, %v654
        %v662 = vcombine.high %v650, %v654
        %v664 = vunpack.c.l.s4 1983009808
        %v665 = vunpack.c.0.s8 %v664
        %v666 = vlaneseq
        %v667 = vshrl.u32 %v666, 7
        %v668 = vsub.s32 %v665, %v667
        %v669 = vrot.slane %v661, %v668
        %v671 = vunpack.c.l.s4 1983009808
        %v672 = vunpack.c.0.s8 %v671
        %v673 = vlaneseq
        %v674 = vshrl.u32 %v673, 7
        %v675 = vsub.s32 %v672, %v674
        %v676 = vrot.slane %v662, %v675
        %v677 = vcombine.low %v652, %v656
        %v678 = vcombine.high %v652, %v656
        %v680 = vunpack.c.l.s4 1983009808
        %v681 = vunpack.c.0.s8 %v680
        %v682 = vlaneseq
        %v683 = vshrl.u32 %v682, 7
        %v684 = vsub.s32 %v681, %v683
        %v685 = vrot.slane %v677, %v684
        %v687 = vunpack.c.l.s4 1983009808
        %v688 = vunpack.c.0.s8 %v687
        %v689 = vlaneseq
        %v690 = vshrl.u32 %v689, 7
        %v691 = vsub.s32 %v688, %v690
        %v692 = vrot.slane %v678, %v691
        %v693 = vcombine.low %v669, %v685
        %v694 = vcombine.high %v669, %v685
        %v696 = vunpack.c.l.s4 1934713408
        %v697 = vunpack.c.0.s8 %v696
        %v698 = vlaneseq
        %v699 = vshrl.u32 %v698, 7
        %v700 = vsub.s32 %v697, %v699
        %v701 = vrot.slane %v693, %v700
        %v703 = vunpack.c.l.s4 1934713408
        %v704 = vunpack.c.0.s8 %v703
        %v705 = vlaneseq
        %v706 = vshrl.u32 %v705, 7
        %v707 = vsub.s32 %v704, %v706
        %v708 = vrot.slane %v694, %v707
        %v709 = vcombine.low %v676, %v692
        %v710 = vcombine.high %v676, %v692
        %v712 = vunpack.c.l.s4 1934713408
        %v713 = vunpack.c.0.s8 %v712
        %v714 = vlaneseq
        %v715 = vshrl.u32 %v714, 7
        %v716 = vsub.s32 %v713, %v715
        %v717 = vrot.slane %v709, %v716
        %v719 = vunpack.c.l.s4 1934713408
        %v720 = vunpack.c.0.s8 %v719
        %v721 = vlaneseq
        %v722 = vshrl.u32 %v721, 7
        %v723 = vsub.s32 %v720, %v722
        %v724 = vrot.slane %v710, %v723
        %v725 = vcombine.high %v701, 0.0
        %v726 = vcombine.high %v708, 0.0
        %v727 = vcombine.high %v717, 0.0
        %v728 = vcombine.high %v724, 0.0
        %v729 = vcombine.low %v701, %v708
        %v731 = vunpack.c.l.s4 1983009808
        %v732 = vunpack.c.0.s8 %v731
        %v733 = vlaneseq
        %v734 = vshrl.u32 %v733, 7
        %v735 = vsub.s32 %v732, %v734
        %v736 = vrot.slane %v729, %v735
        %v737 = vcombine.low %v725, %v726
        %v739 = vunpack.c.l.s4 1983009808
        %v740 = vunpack.c.0.s8 %v739
        %v741 = vlaneseq
        %v742 = vshrl.u32 %v741, 7
        %v743 = vsub.s32 %v740, %v742
        %v744 = vrot.slane %v737, %v743
        %v745 = vcombine.low %v717, %v724
        %v747 = vunpack.c.l.s4 1983009808
        %v748 = vunpack.c.0.s8 %v747
        %v749 = vlaneseq
        %v750 = vshrl.u32 %v749, 7
        %v751 = vsub.s32 %v748, %v750
        %v752 = vrot.slane %v745, %v751
        %v753 = vcombine.low %v727, %v728
        %v755 = vunpack.c.l.s4 1983009808
        %v756 = vunpack.c.0.s8 %v755
        %v757 = vlaneseq
        %v758 = vshrl.u32 %v757, 7
        %v759 = vsub.s32 %v756, %v758
        %v760 = vrot.slane %v753, %v759
        %v761 = vcombine.low %v736, %v744
        %v762 = vcombine.high %v736, %v744
        %v764 = vunpack.c.l.s4 1934713408
        %v765 = vunpack.c.0.s8 %v764
        %v766 = vlaneseq
        %v767 = vshrl.u32 %v766, 7
        %v768 = vsub.s32 %v765, %v767
        %v769 = vrot.slane %v761, %v768
        %v771 = vunpack.c.l.s4 1934713408
        %v772 = vunpack.c.0.s8 %v771
        %v773 = vlaneseq
        %v774 = vshrl.u32 %v773, 7
        %v775 = vsub.s32 %v772, %v774
        %v776 = vrot.slane %v762, %v775
        %v777 = vcombine.low %v752, %v760
        %v778 = vcombine.high %v752, %v760
        %v780 = vunpack.c.l.s4 1934713408
        %v781 = vunpack.c.0.s8 %v780
        %v782 = vlaneseq
        %v783 = vshrl.u32 %v782, 7
        %v784 = vsub.s32 %v781, %v783
        %v785 = vrot.slane %v777, %v784
        %v787 = vunpack.c.l.s4 1934713408
        %v788 = vunpack.c.0.s8 %v787
        %v789 = vlaneseq
        %v790 = vshrl.u32 %v789, 7
        %v791 = vsub.s32 %v788, %v790
        %v792 = vrot.slane %v778, %v791
        %v793 = vcombine.low %v769, %v785
        %v794 = vcombine.high %v769, %v785
        %v795 = vcombine.low %v776, %v792
        %v796 = vcombine.high %v776, %v792
        %vm797 = vcmask 64512
        %v799 = vsel %vm797, %v497, 0
        %v802 = vsel %vm797, %v645, 0
        %804 = vmatprep.subr.mxu0 0.0
        %805 = vmatpush1.xpose.msra.mxu0 %v802
        %806 = vmatprep.subr.mxu0 0.0
        %807 = vmatpush1.xpose.msra.mxu0 0.0
        %808 = vmatprep.subr.mxu0 0.0
        %809 = vmatpush1.xpose.msra.mxu0 0.0
        %810 = vmatprep.subr.mxu0 0.0
        %811 = vmatpush1.xpose.msra.mxu0 0.0
        %812 = vmatprep.subr.mxu0 0.0
        %813 = vmatpush1.xpose.msra.mxu0 0.0
        %814 = vmatprep.subr.mxu0 0.0
        %815 = vmatpush1.xpose.msra.mxu0 0.0
        %816 = vmatprep.subr.mxu0 0.0
        %817 = vmatpush1.xpose.msra.mxu0 0.0
        %818 = vmatprep.subr.mxu0 0.0
        %819 = vmatpush1.xpose.msra.mxu0 0.0
        %820 = vmatprep.subr.mxu0 0.0
        %821 = vmatpush1.xpose.msra.mxu0 0.0
        %822 = vmatprep.subr.mxu0 0.0
        %823 = vmatpush1.xpose.msra.mxu0 0.0
        %824 = vmatprep.subr.mxu0 0.0
        %825 = vmatpush1.xpose.msra.mxu0 0.0
        %826 = vmatprep.subr.mxu0 0.0
        %827 = vmatpush1.xpose.msra.mxu0 0.0
        %828 = vmatprep.subr.mxu0 0.0
        %829 = vmatpush1.xpose.msra.mxu0 0.0
        %830 = vmatprep.subr.mxu0 0.0
        %831 = vmatpush1.xpose.msra.mxu0 0.0
        %832 = vmatprep.subr.mxu0 0.0
        %833 = vmatpush1.xpose.msra.mxu0 0.0
        %834 = vmatprep.subr.mxu0 0.0
        %835 = vmatpush1.xpose.msra.mxu0 0.0
        %836 = vmatprep.subr.mxu0 0.0
        %837 = vmatpush1.xpose.msra.mxu0 0.0
        %838 = vmatprep.subr.mxu0 0.0
        %839 = vmatpush1.xpose.msra.mxu0 0.0
        %840 = vmatprep.subr.mxu0 0.0
        %841 = vmatpush1.xpose.msra.mxu0 0.0
        %842 = vmatprep.subr.mxu0 0.0
        %843 = vmatpush1.xpose.msra.mxu0 0.0
        %844 = vmatprep.subr.mxu0 0.0
        %845 = vmatpush1.xpose.msra.mxu0 0.0
        %846 = vmatprep.subr.mxu0 0.0
        %847 = vmatpush1.xpose.msra.mxu0 0.0
        %848 = vmatprep.subr.mxu0 0.0
        %849 = vmatpush1.xpose.msra.mxu0 0.0
        %850 = vmatprep.subr.mxu0 0.0
        %851 = vmatpush1.xpose.msra.mxu0 0.0
        %852 = vmatprep.subr.mxu0 0.0
        %853 = vmatpush1.xpose.msra.mxu0 0.0
        %854 = vmatprep.subr.mxu0 0.0
        %855 = vmatpush1.xpose.msra.mxu0 0.0
        %856 = vmatprep.subr.mxu0 0.0
        %857 = vmatpush1.xpose.msra.mxu0 0.0
        %858 = vmatprep.subr.mxu0 0.0
        %859 = vmatpush1.xpose.msra.mxu0 0.0
        %860 = vmatprep.subr.mxu0 0.0
        %861 = vmatpush1.xpose.msra.mxu0 0.0
        %862 = vmatprep.subr.mxu0 0.0
        %863 = vmatpush1.xpose.msra.mxu0 0.0
        %864 = vmatprep.subr.mxu0 0.0
        %865 = vmatpush1.xpose.msra.mxu0 0.0
        %866 = vmatprep.subr.mxu0 0.0
        %867 = vmatpush1.xpose.msra.mxu0 0.0
        %868 = vmatprep.mubr.f32.mxu0 0.0
        %869 = vmatmul.mubr.f32.gmra.mrb[0].mxu0 %v799
        %v870 = vpop.f32.mrb[0].mxu0
        %v871 = vadd.f32 0.0, %v870
        %v872 = vpop.f32.mrb[0].mxu0
        %873 = vdwg.mxu0
        %v875 = vsel %vm797, %v498, 0
        %v878 = vsel %vm797, %v646, 0
        %880 = vmatprep.subr.mxu0 0.0
        %881 = vmatpush1.xpose.msra.mxu0 %v878
        %882 = vmatprep.subr.mxu0 0.0
        %883 = vmatpush1.xpose.msra.mxu0 0.0
        %884 = vmatprep.subr.mxu0 0.0
        %885 = vmatpush1.xpose.msra.mxu0 0.0
        %886 = vmatprep.subr.mxu0 0.0
        %887 = vmatpush1.xpose.msra.mxu0 0.0
        %888 = vmatprep.subr.mxu0 0.0
        %889 = vmatpush1.xpose.msra.mxu0 0.0
        %890 = vmatprep.subr.mxu0 0.0
        %891 = vmatpush1.xpose.msra.mxu0 0.0
        %892 = vmatprep.subr.mxu0 0.0
        %893 = vmatpush1.xpose.msra.mxu0 0.0
        %894 = vmatprep.subr.mxu0 0.0
        %895 = vmatpush1.xpose.msra.mxu0 0.0
        %896 = vmatprep.subr.mxu0 0.0
        %897 = vmatpush1.xpose.msra.mxu0 0.0
        %898 = vmatprep.subr.mxu0 0.0
        %899 = vmatpush1.xpose.msra.mxu0 0.0
        %900 = vmatprep.subr.mxu0 0.0
        %901 = vmatpush1.xpose.msra.mxu0 0.0
        %902 = vmatprep.subr.mxu0 0.0
        %903 = vmatpush1.xpose.msra.mxu0 0.0
        %904 = vmatprep.subr.mxu0 0.0
        %905 = vmatpush1.xpose.msra.mxu0 0.0
        %906 = vmatprep.subr.mxu0 0.0
        %907 = vmatpush1.xpose.msra.mxu0 0.0
        %908 = vmatprep.subr.mxu0 0.0
        %909 = vmatpush1.xpose.msra.mxu0 0.0
        %910 = vmatprep.subr.mxu0 0.0
        %911 = vmatpush1.xpose.msra.mxu0 0.0
        %912 = vmatprep.subr.mxu0 0.0
        %913 = vmatpush1.xpose.msra.mxu0 0.0
        %914 = vmatprep.subr.mxu0 0.0
        %915 = vmatpush1.xpose.msra.mxu0 0.0
        %916 = vmatprep.subr.mxu0 0.0
        %917 = vmatpush1.xpose.msra.mxu0 0.0
        %918 = vmatprep.subr.mxu0 0.0
        %919 = vmatpush1.xpose.msra.mxu0 0.0
        %920 = vmatprep.subr.mxu0 0.0
        %921 = vmatpush1.xpose.msra.mxu0 0.0
        %922 = vmatprep.subr.mxu0 0.0
        %923 = vmatpush1.xpose.msra.mxu0 0.0
        %924 = vmatprep.subr.mxu0 0.0
        %925 = vmatpush1.xpose.msra.mxu0 0.0
        %926 = vmatprep.subr.mxu0 0.0
        %927 = vmatpush1.xpose.msra.mxu0 0.0
        %928 = vmatprep.subr.mxu0 0.0
        %929 = vmatpush1.xpose.msra.mxu0 0.0
        %930 = vmatprep.subr.mxu0 0.0
        %931 = vmatpush1.xpose.msra.mxu0 0.0
        %932 = vmatprep.subr.mxu0 0.0
        %933 = vmatpush1.xpose.msra.mxu0 0.0
        %934 = vmatprep.subr.mxu0 0.0
        %935 = vmatpush1.xpose.msra.mxu0 0.0
        %936 = vmatprep.subr.mxu0 0.0
        %937 = vmatpush1.xpose.msra.mxu0 0.0
        %938 = vmatprep.subr.mxu0 0.0
        %939 = vmatpush1.xpose.msra.mxu0 0.0
        %940 = vmatprep.subr.mxu0 0.0
        %941 = vmatpush1.xpose.msra.mxu0 0.0
        %942 = vmatprep.subr.mxu0 0.0
        %943 = vmatpush1.xpose.msra.mxu0 0.0
        %944 = vmatprep.mubr.f32.mxu0 0.0
        %945 = vmatmul.mubr.f32.gmra.mrb[0].mxu0 %v875
        %v946 = vpop.f32.mrb[0].mxu0
        %v947 = vadd.f32 0.0, %v946
        %v948 = vpop.f32.mrb[0].mxu0
        %949 = vdwg.mxu0
        %v951 = vsel %vm797, %v499, 0
        %v954 = vsel %vm797, %v647, 0
        %956 = vmatprep.subr.mxu0 0.0
        %957 = vmatpush1.xpose.msra.mxu0 %v954
        %958 = vmatprep.subr.mxu0 0.0
        %959 = vmatpush1.xpose.msra.mxu0 0.0
        %960 = vmatprep.subr.mxu0 0.0
        %961 = vmatpush1.xpose.msra.mxu0 0.0
        %962 = vmatprep.subr.mxu0 0.0
        %963 = vmatpush1.xpose.msra.mxu0 0.0
        %964 = vmatprep.subr.mxu0 0.0
        %965 = vmatpush1.xpose.msra.mxu0 0.0
        %966 = vmatprep.subr.mxu0 0.0
        %967 = vmatpush1.xpose.msra.mxu0 0.0
        %968 = vmatprep.subr.mxu0 0.0
        %969 = vmatpush1.xpose.msra.mxu0 0.0
        %970 = vmatprep.subr.mxu0 0.0
        %971 = vmatpush1.xpose.msra.mxu0 0.0
        %972 = vmatprep.subr.mxu0 0.0
        %973 = vmatpush1.xpose.msra.mxu0 0.0
        %974 = vmatprep.subr.mxu0 0.0
        %975 = vmatpush1.xpose.msra.mxu0 0.0
        %976 = vmatprep.subr.mxu0 0.0
        %977 = vmatpush1.xpose.msra.mxu0 0.0
        %978 = vmatprep.subr.mxu0 0.0
        %979 = vmatpush1.xpose.msra.mxu0 0.0
        %980 = vmatprep.subr.mxu0 0.0
        %981 = vmatpush1.xpose.msra.mxu0 0.0
        %982 = vmatprep.subr.mxu0 0.0
        %983 = vmatpush1.xpose.msra.mxu0 0.0
        %984 = vmatprep.subr.mxu0 0.0
        %985 = vmatpush1.xpose.msra.mxu0 0.0
        %986 = vmatprep.subr.mxu0 0.0
        %987 = vmatpush1.xpose.msra.mxu0 0.0
        %988 = vmatprep.subr.mxu0 0.0
        %989 = vmatpush1.xpose.msra.mxu0 0.0
        %990 = vmatprep.subr.mxu0 0.0
        %991 = vmatpush1.xpose.msra.mxu0 0.0
        %992 = vmatprep.subr.mxu0 0.0
        %993 = vmatpush1.xpose.msra.mxu0 0.0
        %994 = vmatprep.subr.mxu0 0.0
        %995 = vmatpush1.xpose.msra.mxu0 0.0
        %996 = vmatprep.subr.mxu0 0.0
        %997 = vmatpush1.xpose.msra.mxu0 0.0
        %998 = vmatprep.subr.mxu0 0.0
        %999 = vmatpush1.xpose.msra.mxu0 0.0
        %1000 = vmatprep.subr.mxu0 0.0
        %1001 = vmatpush1.xpose.msra.mxu0 0.0
        %1002 = vmatprep.subr.mxu0 0.0
        %1003 = vmatpush1.xpose.msra.mxu0 0.0
        %1004 = vmatprep.subr.mxu0 0.0
        %1005 = vmatpush1.xpose.msra.mxu0 0.0
        %1006 = vmatprep.subr.mxu0 0.0
        %1007 = vmatpush1.xpose.msra.mxu0 0.0
        %1008 = vmatprep.subr.mxu0 0.0
        %1009 = vmatpush1.xpose.msra.mxu0 0.0
        %1010 = vmatprep.subr.mxu0 0.0
        %1011 = vmatpush1.xpose.msra.mxu0 0.0
        %1012 = vmatprep.subr.mxu0 0.0
        %1013 = vmatpush1.xpose.msra.mxu0 0.0
        %1014 = vmatprep.subr.mxu0 0.0
        %1015 = vmatpush1.xpose.msra.mxu0 0.0
        %1016 = vmatprep.subr.mxu0 0.0
        %1017 = vmatpush1.xpose.msra.mxu0 0.0
        %1018 = vmatprep.subr.mxu0 0.0
        %1019 = vmatpush1.xpose.msra.mxu0 0.0
        %1020 = vmatprep.mubr.f32.mxu0 0.0
        %1021 = vmatmul.mubr.f32.gmra.mrb[0].mxu0 %v951
        %v1022 = vpop.f32.mrb[0].mxu0
        %v1023 = vadd.f32 0.0, %v1022
        %v1024 = vpop.f32.mrb[0].mxu0
        %1025 = vdwg.mxu0
        %v1027 = vsel %vm797, %v500, 0
        %v1030 = vsel %vm797, %v648, 0
        %1032 = vmatprep.subr.mxu0 0.0
        %1033 = vmatpush1.xpose.msra.mxu0 %v1030
        %1034 = vmatprep.subr.mxu0 0.0
        %1035 = vmatpush1.xpose.msra.mxu0 0.0
        %1036 = vmatprep.subr.mxu0 0.0
        %1037 = vmatpush1.xpose.msra.mxu0 0.0
        %1038 = vmatprep.subr.mxu0 0.0
        %1039 = vmatpush1.xpose.msra.mxu0 0.0
        %1040 = vmatprep.subr.mxu0 0.0
        %1041 = vmatpush1.xpose.msra.mxu0 0.0
        %1042 = vmatprep.subr.mxu0 0.0
        %1043 = vmatpush1.xpose.msra.mxu0 0.0
        %1044 = vmatprep.subr.mxu0 0.0
        %1045 = vmatpush1.xpose.msra.mxu0 0.0
        %1046 = vmatprep.subr.mxu0 0.0
        %1047 = vmatpush1.xpose.msra.mxu0 0.0
        %1048 = vmatprep.subr.mxu0 0.0
        %1049 = vmatpush1.xpose.msra.mxu0 0.0
        %1050 = vmatprep.subr.mxu0 0.0
        %1051 = vmatpush1.xpose.msra.mxu0 0.0
        %1052 = vmatprep.subr.mxu0 0.0
        %1053 = vmatpush1.xpose.msra.mxu0 0.0
        %1054 = vmatprep.subr.mxu0 0.0
        %1055 = vmatpush1.xpose.msra.mxu0 0.0
        %1056 = vmatprep.subr.mxu0 0.0
        %1057 = vmatpush1.xpose.msra.mxu0 0.0
        %1058 = vmatprep.subr.mxu0 0.0
        %1059 = vmatpush1.xpose.msra.mxu0 0.0
        %1060 = vmatprep.subr.mxu0 0.0
        %1061 = vmatpush1.xpose.msra.mxu0 0.0
        %1062 = vmatprep.subr.mxu0 0.0
        %1063 = vmatpush1.xpose.msra.mxu0 0.0
        %1064 = vmatprep.subr.mxu0 0.0
        %1065 = vmatpush1.xpose.msra.mxu0 0.0
        %1066 = vmatprep.subr.mxu0 0.0
        %1067 = vmatpush1.xpose.msra.mxu0 0.0
        %1068 = vmatprep.subr.mxu0 0.0
        %1069 = vmatpush1.xpose.msra.mxu0 0.0
        %1070 = vmatprep.subr.mxu0 0.0
        %1071 = vmatpush1.xpose.msra.mxu0 0.0
        %1072 = vmatprep.subr.mxu0 0.0
        %1073 = vmatpush1.xpose.msra.mxu0 0.0
        %1074 = vmatprep.subr.mxu0 0.0
        %1075 = vmatpush1.xpose.msra.mxu0 0.0
        %1076 = vmatprep.subr.mxu0 0.0
        %1077 = vmatpush1.xpose.msra.mxu0 0.0
        %1078 = vmatprep.subr.mxu0 0.0
        %1079 = vmatpush1.xpose.msra.mxu0 0.0
        %1080 = vmatprep.subr.mxu0 0.0
        %1081 = vmatpush1.xpose.msra.mxu0 0.0
        %1082 = vmatprep.subr.mxu0 0.0
        %1083 = vmatpush1.xpose.msra.mxu0 0.0
        %1084 = vmatprep.subr.mxu0 0.0
        %1085 = vmatpush1.xpose.msra.mxu0 0.0
        %1086 = vmatprep.subr.mxu0 0.0
        %1087 = vmatpush1.xpose.msra.mxu0 0.0
        %1088 = vmatprep.subr.mxu0 0.0
        %1089 = vmatpush1.xpose.msra.mxu0 0.0
        %1090 = vmatprep.subr.mxu0 0.0
        %1091 = vmatpush1.xpose.msra.mxu0 0.0
        %1092 = vmatprep.subr.mxu0 0.0
        %1093 = vmatpush1.xpose.msra.mxu0 0.0
        %1094 = vmatprep.subr.mxu0 0.0
        %1095 = vmatpush1.xpose.msra.mxu0 0.0
        %1096 = vmatprep.mubr.f32.mxu0 0.0
        %1097 = vmatmul.mubr.f32.gmra.mrb[0].mxu0 %v1027
        %v1098 = vpop.f32.mrb[0].mxu0
        %v1099 = vadd.f32 0.0, %v1098
        %v1100 = vpop.f32.mrb[0].mxu0
        %1101 = vdwg.mxu0
        %v1102 = vsel %vm797, %v871, -inf
        %1103 = vmax.xlane.f32.xlu0 %v1102
        %v1104 = vpop.xlane.xlu0 %1103
        %v1105 = vsel %vm797, %v947, -inf
        %1106 = vmax.xlane.f32.xlu0 %v1105
        %v1107 = vpop.xlane.xlu0 %1106
        %v1108 = vsel %vm797, %v1023, -inf
        %1109 = vmax.xlane.f32.xlu0 %v1108
        %v1110 = vpop.xlane.xlu0 %1109
        %v1111 = vsel %vm797, %v1099, -inf
        %1112 = vmax.xlane.f32.xlu0 %v1111
        %v1113 = vpop.xlane.xlu0 %1112
        %v1114 = vsub.f32 %v871, %v1104
        %v1115 = vsub.f32 %v947, %v1107
        %v1116 = vsub.f32 %v1023, %v1110
        %v1117 = vsub.f32 %v1099, %v1113
        %v1118 = vmul.f32 %v1114, 1.442695
        %v1119 = vpow.pop %v1118
        %v1120 = vmul.f32 %v1115, 1.442695
        %v1121 = vpow.pop %v1120
        %v1122 = vmul.f32 %v1116, 1.442695
        %v1123 = vpow.pop %v1122
        %v1124 = vmul.f32 %v1117, 1.442695
        %v1125 = vpow.pop %v1124
        %v1126 = vsel %vm797, %v1119, 0.0
        %1127 = vadd.xlane.f32.xlu0 %v1126
        %v1128 = vpop.xlane.xlu0 %1127
        %v1129 = vsel %vm797, %v1121, 0.0
        %1130 = vadd.xlane.f32.xlu0 %v1129
        %v1131 = vpop.xlane.xlu0 %1130
        %v1132 = vsel %vm797, %v1123, 0.0
        %1133 = vadd.xlane.f32.xlu0 %v1132
        %v1134 = vpop.xlane.xlu0 %1133
        %v1135 = vsel %vm797, %v1125, 0.0
        %1136 = vadd.xlane.f32.xlu0 %v1135
        %v1137 = vpop.xlane.xlu0 %1136
        %v1138 = vrcp.pop %v1128
        %v1139 = vmul.f32 %v1119, %v1138
        %v1140 = vrcp.pop %v1131
        %v1141 = vmul.f32 %v1121, %v1140
        %v1142 = vrcp.pop %v1134
        %v1143 = vmul.f32 %v1123, %v1142
        %v1144 = vrcp.pop %v1137
        %v1145 = vmul.f32 %v1125, %v1144
        %v1147 = vsel %vm797, %v1139, 0
        %1149 = vmatprep.subr.mxu0 0.0
        %1150 = vmatpush1.msra.mxu0 %v793
        %1151 = vmatprep.subr.mxu0 0.0
        %1152 = vmatpush1.msra.mxu0 0.0
        %1153 = vmatprep.subr.mxu0 0.0
        %1154 = vmatpush1.msra.mxu0 0.0
        %1155 = vmatprep.subr.mxu0 0.0
        %1156 = vmatpush1.msra.mxu0 0.0
        %1157 = vmatprep.subr.mxu0 0.0
        %1158 = vmatpush1.msra.mxu0 0.0
        %1159 = vmatprep.subr.mxu0 0.0
        %1160 = vmatpush1.msra.mxu0 0.0
        %1161 = vmatprep.subr.mxu0 0.0
        %1162 = vmatpush1.msra.mxu0 0.0
        %1163 = vmatprep.subr.mxu0 0.0
        %1164 = vmatpush1.msra.mxu0 0.0
        %1165 = vmatprep.subr.mxu0 0.0
        %1166 = vmatpush1.msra.mxu0 0.0
        %1167 = vmatprep.subr.mxu0 0.0
        %1168 = vmatpush1.msra.mxu0 0.0
        %1169 = vmatprep.subr.mxu0 0.0
        %1170 = vmatpush1.msra.mxu0 0.0
        %1171 = vmatprep.subr.mxu0 0.0
        %1172 = vmatpush1.msra.mxu0 0.0
        %1173 = vmatprep.subr.mxu0 0.0
        %1174 = vmatpush1.msra.mxu0 0.0
        %1175 = vmatprep.subr.mxu0 0.0
        %1176 = vmatpush1.msra.mxu0 0.0
        %1177 = vmatprep.subr.mxu0 0.0
        %1178 = vmatpush1.msra.mxu0 0.0
        %1179 = vmatprep.subr.mxu0 0.0
        %1180 = vmatpush1.msra.mxu0 0.0
        %1181 = vmatprep.subr.mxu0 0.0
        %1182 = vmatpush1.msra.mxu0 0.0
        %1183 = vmatprep.subr.mxu0 0.0
        %1184 = vmatpush1.msra.mxu0 0.0
        %1185 = vmatprep.subr.mxu0 0.0
        %1186 = vmatpush1.msra.mxu0 0.0
        %1187 = vmatprep.subr.mxu0 0.0
        %1188 = vmatpush1.msra.mxu0 0.0
        %1189 = vmatprep.subr.mxu0 0.0
        %1190 = vmatpush1.msra.mxu0 0.0
        %1191 = vmatprep.subr.mxu0 0.0
        %1192 = vmatpush1.msra.mxu0 0.0
        %1193 = vmatprep.subr.mxu0 0.0
        %1194 = vmatpush1.msra.mxu0 0.0
        %1195 = vmatprep.subr.mxu0 0.0
        %1196 = vmatpush1.msra.mxu0 0.0
        %1197 = vmatprep.subr.mxu0 0.0
        %1198 = vmatpush1.msra.mxu0 0.0
        %1199 = vmatprep.subr.mxu0 0.0
        %1200 = vmatpush1.msra.mxu0 0.0
        %1201 = vmatprep.subr.mxu0 0.0
        %1202 = vmatpush1.msra.mxu0 0.0
        %1203 = vmatprep.subr.mxu0 0.0
        %1204 = vmatpush1.msra.mxu0 0.0
        %1205 = vmatprep.subr.mxu0 0.0
        %1206 = vmatpush1.msra.mxu0 0.0
        %1207 = vmatprep.subr.mxu0 0.0
        %1208 = vmatpush1.msra.mxu0 0.0
        %1209 = vmatprep.subr.mxu0 0.0
        %1210 = vmatpush1.msra.mxu0 0.0
        %1211 = vmatprep.subr.mxu0 0.0
        %1212 = vmatpush1.msra.mxu0 0.0
        %1213 = vmatprep.mubr.f32.mxu0 0.0
        %1214 = vmatmul.mubr.f32.gmra.mrb[0].mxu0 %v1147
        %v1215 = vpop.f32.mrb[0].mxu0
        %v1216 = vadd.f32 0.0, %v1215
        %v1217 = vpop.f32.mrb[0].mxu0
        %1218 = vdwg.mxu0
        %v1220 = vsel %vm797, %v1141, 0
        %1222 = vmatprep.subr.mxu0 0.0
        %1223 = vmatpush1.msra.mxu0 %v794
        %1224 = vmatprep.subr.mxu0 0.0
        %1225 = vmatpush1.msra.mxu0 0.0
        %1226 = vmatprep.subr.mxu0 0.0
        %1227 = vmatpush1.msra.mxu0 0.0
        %1228 = vmatprep.subr.mxu0 0.0
        %1229 = vmatpush1.msra.mxu0 0.0
        %1230 = vmatprep.subr.mxu0 0.0
        %1231 = vmatpush1.msra.mxu0 0.0
        %1232 = vmatprep.subr.mxu0 0.0
        %1233 = vmatpush1.msra.mxu0 0.0
        %1234 = vmatprep.subr.mxu0 0.0
        %1235 = vmatpush1.msra.mxu0 0.0
        %1236 = vmatprep.subr.mxu0 0.0
        %1237 = vmatpush1.msra.mxu0 0.0
        %1238 = vmatprep.subr.mxu0 0.0
        %1239 = vmatpush1.msra.mxu0 0.0
        %1240 = vmatprep.subr.mxu0 0.0
        %1241 = vmatpush1.msra.mxu0 0.0
        %1242 = vmatprep.subr.mxu0 0.0
        %1243 = vmatpush1.msra.mxu0 0.0
        %1244 = vmatprep.subr.mxu0 0.0
        %1245 = vmatpush1.msra.mxu0 0.0
        %1246 = vmatprep.subr.mxu0 0.0
        %1247 = vmatpush1.msra.mxu0 0.0
        %1248 = vmatprep.subr.mxu0 0.0
        %1249 = vmatpush1.msra.mxu0 0.0
        %1250 = vmatprep.subr.mxu0 0.0
        %1251 = vmatpush1.msra.mxu0 0.0
        %1252 = vmatprep.subr.mxu0 0.0
        %1253 = vmatpush1.msra.mxu0 0.0
        %1254 = vmatprep.subr.mxu0 0.0
        %1255 = vmatpush1.msra.mxu0 0.0
        %1256 = vmatprep.subr.mxu0 0.0
        %1257 = vmatpush1.msra.mxu0 0.0
        %1258 = vmatprep.subr.mxu0 0.0
        %1259 = vmatpush1.msra.mxu0 0.0
        %1260 = vmatprep.subr.mxu0 0.0
        %1261 = vmatpush1.msra.mxu0 0.0
        %1262 = vmatprep.subr.mxu0 0.0
        %1263 = vmatpush1.msra.mxu0 0.0
        %1264 = vmatprep.subr.mxu0 0.0
        %1265 = vmatpush1.msra.mxu0 0.0
        %1266 = vmatprep.subr.mxu0 0.0
        %1267 = vmatpush1.msra.mxu0 0.0
        %1268 = vmatprep.subr.mxu0 0.0
        %1269 = vmatpush1.msra.mxu0 0.0
        %1270 = vmatprep.subr.mxu0 0.0
        %1271 = vmatpush1.msra.mxu0 0.0
        %1272 = vmatprep.subr.mxu0 0.0
        %1273 = vmatpush1.msra.mxu0 0.0
        %1274 = vmatprep.subr.mxu0 0.0
        %1275 = vmatpush1.msra.mxu0 0.0
        %1276 = vmatprep.subr.mxu0 0.0
        %1277 = vmatpush1.msra.mxu0 0.0
        %1278 = vmatprep.subr.mxu0 0.0
        %1279 = vmatpush1.msra.mxu0 0.0
        %1280 = vmatprep.subr.mxu0 0.0
        %1281 = vmatpush1.msra.mxu0 0.0
        %1282 = vmatprep.subr.mxu0 0.0
        %1283 = vmatpush1.msra.mxu0 0.0
        %1284 = vmatprep.subr.mxu0 0.0
        %1285 = vmatpush1.msra.mxu0 0.0
        %1286 = vmatprep.mubr.f32.mxu0 0.0
        %1287 = vmatmul.mubr.f32.gmra.mrb[0].mxu0 %v1220
        %v1288 = vpop.f32.mrb[0].mxu0
        %v1289 = vadd.f32 0.0, %v1288
        %v1290 = vpop.f32.mrb[0].mxu0
        %1291 = vdwg.mxu0
        %v1293 = vsel %vm797, %v1143, 0
        %1295 = vmatprep.subr.mxu0 0.0
        %1296 = vmatpush1.msra.mxu0 %v795
        %1297 = vmatprep.subr.mxu0 0.0
        %1298 = vmatpush1.msra.mxu0 0.0
        %1299 = vmatprep.subr.mxu0 0.0
        %1300 = vmatpush1.msra.mxu0 0.0
        %1301 = vmatprep.subr.mxu0 0.0
        %1302 = vmatpush1.msra.mxu0 0.0
        %1303 = vmatprep.subr.mxu0 0.0
        %1304 = vmatpush1.msra.mxu0 0.0
        %1305 = vmatprep.subr.mxu0 0.0
        %1306 = vmatpush1.msra.mxu0 0.0
        %1307 = vmatprep.subr.mxu0 0.0
        %1308 = vmatpush1.msra.mxu0 0.0
        %1309 = vmatprep.subr.mxu0 0.0
        %1310 = vmatpush1.msra.mxu0 0.0
        %1311 = vmatprep.subr.mxu0 0.0
        %1312 = vmatpush1.msra.mxu0 0.0
        %1313 = vmatprep.subr.mxu0 0.0
        %1314 = vmatpush1.msra.mxu0 0.0
        %1315 = vmatprep.subr.mxu0 0.0
        %1316 = vmatpush1.msra.mxu0 0.0
        %1317 = vmatprep.subr.mxu0 0.0
        %1318 = vmatpush1.msra.mxu0 0.0
        %1319 = vmatprep.subr.mxu0 0.0
        %1320 = vmatpush1.msra.mxu0 0.0
        %1321 = vmatprep.subr.mxu0 0.0
        %1322 = vmatpush1.msra.mxu0 0.0
        %1323 = vmatprep.subr.mxu0 0.0
        %1324 = vmatpush1.msra.mxu0 0.0
        %1325 = vmatprep.subr.mxu0 0.0
        %1326 = vmatpush1.msra.mxu0 0.0
        %1327 = vmatprep.subr.mxu0 0.0
        %1328 = vmatpush1.msra.mxu0 0.0
        %1329 = vmatprep.subr.mxu0 0.0
        %1330 = vmatpush1.msra.mxu0 0.0
        %1331 = vmatprep.subr.mxu0 0.0
        %1332 = vmatpush1.msra.mxu0 0.0
        %1333 = vmatprep.subr.mxu0 0.0
        %1334 = vmatpush1.msra.mxu0 0.0
        %1335 = vmatprep.subr.mxu0 0.0
        %1336 = vmatpush1.msra.mxu0 0.0
        %1337 = vmatprep.subr.mxu0 0.0
        %1338 = vmatpush1.msra.mxu0 0.0
        %1339 = vmatprep.subr.mxu0 0.0
        %1340 = vmatpush1.msra.mxu0 0.0
        %1341 = vmatprep.subr.mxu0 0.0
        %1342 = vmatpush1.msra.mxu0 0.0
        %1343 = vmatprep.subr.mxu0 0.0
        %1344 = vmatpush1.msra.mxu0 0.0
        %1345 = vmatprep.subr.mxu0 0.0
        %1346 = vmatpush1.msra.mxu0 0.0
        %1347 = vmatprep.subr.mxu0 0.0
        %1348 = vmatpush1.msra.mxu0 0.0
        %1349 = vmatprep.subr.mxu0 0.0
        %1350 = vmatpush1.msra.mxu0 0.0
        %1351 = vmatprep.subr.mxu0 0.0
        %1352 = vmatpush1.msra.mxu0 0.0
        %1353 = vmatprep.subr.mxu0 0.0
        %1354 = vmatpush1.msra.mxu0 0.0
        %1355 = vmatprep.subr.mxu0 0.0
        %1356 = vmatpush1.msra.mxu0 0.0
        %1357 = vmatprep.subr.mxu0 0.0
        %1358 = vmatpush1.msra.mxu0 0.0
        %1359 = vmatprep.mubr.f32.mxu0 0.0
        %1360 = vmatmul.mubr.f32.gmra.mrb[0].mxu0 %v1293
        %v1361 = vpop.f32.mrb[0].mxu0
        %v1362 = vadd.f32 0.0, %v1361
        %v1363 = vpop.f32.mrb[0].mxu0
        %1364 = vdwg.mxu0
        %v1366 = vsel %vm797, %v1145, 0
        %1368 = vmatprep.subr.mxu0 0.0
        %1369 = vmatpush1.msra.mxu0 %v796
        %1370 = vmatprep.subr.mxu0 0.0
        %1371 = vmatpush1.msra.mxu0 0.0
        %1372 = vmatprep.subr.mxu0 0.0
        %1373 = vmatpush1.msra.mxu0 0.0
        %1374 = vmatprep.subr.mxu0 0.0
        %1375 = vmatpush1.msra.mxu0 0.0
        %1376 = vmatprep.subr.mxu0 0.0
        %1377 = vmatpush1.msra.mxu0 0.0
        %1378 = vmatprep.subr.mxu0 0.0
        %1379 = vmatpush1.msra.mxu0 0.0
        %1380 = vmatprep.subr.mxu0 0.0
        %1381 = vmatpush1.msra.mxu0 0.0
        %1382 = vmatprep.subr.mxu0 0.0
        %1383 = vmatpush1.msra.mxu0 0.0
        %1384 = vmatprep.subr.mxu0 0.0
        %1385 = vmatpush1.msra.mxu0 0.0
        %1386 = vmatprep.subr.mxu0 0.0
        %1387 = vmatpush1.msra.mxu0 0.0
        %1388 = vmatprep.subr.mxu0 0.0
        %1389 = vmatpush1.msra.mxu0 0.0
        %1390 = vmatprep.subr.mxu0 0.0
        %1391 = vmatpush1.msra.mxu0 0.0
        %1392 = vmatprep.subr.mxu0 0.0
        %1393 = vmatpush1.msra.mxu0 0.0
        %1394 = vmatprep.subr.mxu0 0.0
        %1395 = vmatpush1.msra.mxu0 0.0
        %1396 = vmatprep.subr.mxu0 0.0
        %1397 = vmatpush1.msra.mxu0 0.0
        %1398 = vmatprep.subr.mxu0 0.0
        %1399 = vmatpush1.msra.mxu0 0.0
        %1400 = vmatprep.subr.mxu0 0.0
        %1401 = vmatpush1.msra.mxu0 0.0
        %1402 = vmatprep.subr.mxu0 0.0
        %1403 = vmatpush1.msra.mxu0 0.0
        %1404 = vmatprep.subr.mxu0 0.0
        %1405 = vmatpush1.msra.mxu0 0.0
        %1406 = vmatprep.subr.mxu0 0.0
        %1407 = vmatpush1.msra.mxu0 0.0
        %1408 = vmatprep.subr.mxu0 0.0
        %1409 = vmatpush1.msra.mxu0 0.0
        %1410 = vmatprep.subr.mxu0 0.0
        %1411 = vmatpush1.msra.mxu0 0.0
        %1412 = vmatprep.subr.mxu0 0.0
        %1413 = vmatpush1.msra.mxu0 0.0
        %1414 = vmatprep.subr.mxu0 0.0
        %1415 = vmatpush1.msra.mxu0 0.0
        %1416 = vmatprep.subr.mxu0 0.0
        %1417 = vmatpush1.msra.mxu0 0.0
        %1418 = vmatprep.subr.mxu0 0.0
        %1419 = vmatpush1.msra.mxu0 0.0
        %1420 = vmatprep.subr.mxu0 0.0
        %1421 = vmatpush1.msra.mxu0 0.0
        %1422 = vmatprep.subr.mxu0 0.0
        %1423 = vmatpush1.msra.mxu0 0.0
        %1424 = vmatprep.subr.mxu0 0.0
        %1425 = vmatpush1.msra.mxu0 0.0
        %1426 = vmatprep.subr.mxu0 0.0
        %1427 = vmatpush1.msra.mxu0 0.0
        %1428 = vmatprep.subr.mxu0 0.0
        %1429 = vmatpush1.msra.mxu0 0.0
        %1430 = vmatprep.subr.mxu0 0.0
        %1431 = vmatpush1.msra.mxu0 0.0
        %1432 = vmatprep.mubr.f32.mxu0 0.0
        %1433 = vmatmul.mubr.f32.gmra.mrb[0].mxu0 %v1366
        %v1434 = vpop.f32.mrb[0].mxu0
        %v1435 = vadd.f32 0.0, %v1434
        %v1436 = vpop.f32.mrb[0].mxu0
        %1437 = vdwg.mxu0
        %v1438 = vcombine.low %v1216, %v1362
        %v1439 = vcombine.high %v1216, %v1362
        %v1441 = vunpack.c.l.s4 1983009808
        %v1442 = vunpack.c.0.s8 %v1441
        %v1443 = vlaneseq
        %v1444 = vshrl.u32 %v1443, 7
        %v1445 = vsub.s32 %v1442, %v1444
        %v1446 = vrot.slane %v1438, %v1445
        %v1448 = vunpack.c.l.s4 1983009808
        %v1449 = vunpack.c.0.s8 %v1448
        %v1450 = vlaneseq
        %v1451 = vshrl.u32 %v1450, 7
        %v1452 = vsub.s32 %v1449, %v1451
        %v1453 = vrot.slane %v1439, %v1452
        %v1454 = vcombine.low %v1289, %v1435
        %v1455 = vcombine.high %v1289, %v1435
        %v1457 = vunpack.c.l.s4 1983009808
        %v1458 = vunpack.c.0.s8 %v1457
        %v1459 = vlaneseq
        %v1460 = vshrl.u32 %v1459, 7
        %v1461 = vsub.s32 %v1458, %v1460
        %v1462 = vrot.slane %v1454, %v1461
        %v1464 = vunpack.c.l.s4 1983009808
        %v1465 = vunpack.c.0.s8 %v1464
        %v1466 = vlaneseq
        %v1467 = vshrl.u32 %v1466, 7
        %v1468 = vsub.s32 %v1465, %v1467
        %v1469 = vrot.slane %v1455, %v1468
        %v1470 = vcombine.low %v1446, %v1462
        %v1471 = vcombine.high %v1446, %v1462
        %v1473 = vunpack.c.l.s4 1934713408
        %v1474 = vunpack.c.0.s8 %v1473
        %v1475 = vlaneseq
        %v1476 = vshrl.u32 %v1475, 7
        %v1477 = vsub.s32 %v1474, %v1476
        %v1478 = vrot.slane %v1470, %v1477
        %v1480 = vunpack.c.l.s4 1934713408
        %v1481 = vunpack.c.0.s8 %v1480
        %v1482 = vlaneseq
        %v1483 = vshrl.u32 %v1482, 7
        %v1484 = vsub.s32 %v1481, %v1483
        %v1485 = vrot.slane %v1471, %v1484
        %v1486 = vcombine.low %v1453, %v1469
        %v1487 = vcombine.high %v1453, %v1469
        %v1489 = vunpack.c.l.s4 1934713408
        %v1490 = vunpack.c.0.s8 %v1489
        %v1491 = vlaneseq
        %v1492 = vshrl.u32 %v1491, 7
        %v1493 = vsub.s32 %v1490, %v1492
        %v1494 = vrot.slane %v1486, %v1493
        %v1496 = vunpack.c.l.s4 1934713408
        %v1497 = vunpack.c.0.s8 %v1496
        %v1498 = vlaneseq
        %v1499 = vshrl.u32 %v1498, 7
        %v1500 = vsub.s32 %v1497, %v1499
        %v1501 = vrot.slane %v1487, %v1500
        %v1502 = vcombine.high %v1478, 0.0
        %v1503 = vcombine.high %v1485, 0.0
        %v1504 = vcombine.high %v1494, 0.0
        %v1505 = vcombine.high %v1501, 0.0
        %v1506 = vcombine.low %v1478, %v1485
        %v1508 = vunpack.c.l.s4 1983009808
        %v1509 = vunpack.c.0.s8 %v1508
        %v1510 = vlaneseq
        %v1511 = vshrl.u32 %v1510, 7
        %v1512 = vsub.s32 %v1509, %v1511
        %v1513 = vrot.slane %v1506, %v1512
        %v1514 = vcombine.low %v1502, %v1503
        %v1516 = vunpack.c.l.s4 1983009808
        %v1517 = vunpack.c.0.s8 %v1516
        %v1518 = vlaneseq
        %v1519 = vshrl.u32 %v1518, 7
        %v1520 = vsub.s32 %v1517, %v1519
        %v1521 = vrot.slane %v1514, %v1520
        %v1522 = vcombine.low %v1494, %v1501
        %v1524 = vunpack.c.l.s4 1983009808
        %v1525 = vunpack.c.0.s8 %v1524
        %v1526 = vlaneseq
        %v1527 = vshrl.u32 %v1526, 7
        %v1528 = vsub.s32 %v1525, %v1527
        %v1529 = vrot.slane %v1522, %v1528
        %v1530 = vcombine.low %v1504, %v1505
        %v1532 = vunpack.c.l.s4 1983009808
        %v1533 = vunpack.c.0.s8 %v1532
        %v1534 = vlaneseq
        %v1535 = vshrl.u32 %v1534, 7
        %v1536 = vsub.s32 %v1533, %v1535
        %v1537 = vrot.slane %v1530, %v1536
        %v1538 = vcombine.low %v1513, %v1521
        %v1539 = vcombine.high %v1513, %v1521
        %v1541 = vunpack.c.l.s4 1934713408
        %v1542 = vunpack.c.0.s8 %v1541
        %v1543 = vlaneseq
        %v1544 = vshrl.u32 %v1543, 7
        %v1545 = vsub.s32 %v1542, %v1544
        %v1546 = vrot.slane %v1538, %v1545
        %v1548 = vunpack.c.l.s4 1934713408
        %v1549 = vunpack.c.0.s8 %v1548
        %v1550 = vlaneseq
        %v1551 = vshrl.u32 %v1550, 7
        %v1552 = vsub.s32 %v1549, %v1551
        %v1553 = vrot.slane %v1539, %v1552
        %v1554 = vcombine.low %v1529, %v1537
        %v1555 = vcombine.high %v1529, %v1537
        %v1557 = vunpack.c.l.s4 1934713408
        %v1558 = vunpack.c.0.s8 %v1557
        %v1559 = vlaneseq
        %v1560 = vshrl.u32 %v1559, 7
        %v1561 = vsub.s32 %v1558, %v1560
        %v1562 = vrot.slane %v1554, %v1561
        %v1564 = vunpack.c.l.s4 1934713408
        %v1565 = vunpack.c.0.s8 %v1564
        %v1566 = vlaneseq
        %v1567 = vshrl.u32 %v1566, 7
        %v1568 = vsub.s32 %v1565, %v1567
        %v1569 = vrot.slane %v1555, %v1568
        %v1570 = vcombine.low %v1546, %v1562
        %v1571 = vcombine.high %v1546, %v1562
        %v1572 = vcombine.low %v1553, %v1569
        %v1573 = vcombine.high %v1553, %v1569
        %1575 = vrot.lane.b32.xlu0 %v1571, 8
        %v1576 = vpop.permute.xlu0 %1575
        %1579 = vrot.lane.b32.xlu0 %v1572, 16
        %v1580 = vpop.permute.xlu0 %1579
        %1583 = vrot.lane.b32.xlu0 %v1573, 24
        %v1584 = vpop.permute.xlu0 %1583
        %v1586 = vsel %vm797, %v1570, %v1576
        %vm1587 = vcmask 130048
        %v1588 = vsel %vm1587, %v1586, %v1580
        %vm1589 = vcmask 195584
        %v1590 = vsel %vm1589, %v1588, %v1584
        %v1591 = vld [vmem:[#allocation7] sm:$0xff]
        %v1592 = vld [vmem:[#allocation7 + $0x8] sm:$0xff]
        %v1593 = vld [vmem:[#allocation7 + $0x10] sm:$0xff]
        %v1594 = vld [vmem:[#allocation7 + $0x18] sm:$0xff]
        %v1595 = vld [vmem:[%s4] sm:$0x1]
        %v1597 = vlaneseq
        %v1598 = vshrl.u32 %v1597, 7
        %v1599 = vsub.s32 0, %v1598
        %v1600 = vrot.slane %v1595, %v1599
        %v1603 = vsel %vm281, %v1590, 0
        %1605 = vmatprep.subr.mxu0 0.0
        %1606 = vmatpush1.msra.mxu0 %v1591
        %1607 = vmatprep.subr.mxu0 0.0
        %1608 = vmatpush1.msra.mxu0 %v1592
        %1609 = vmatprep.subr.mxu0 0.0
        %1610 = vmatpush1.msra.mxu0 %v1593
        %1611 = vmatprep.subr.mxu0 0.0
        %1612 = vmatpush1.msra.mxu0 %v1594
        %1613 = vmatprep.subr.mxu0 0.0
        %1614 = vmatpush1.msra.mxu0 0.0
        %1615 = vmatprep.subr.mxu0 0.0
        %1616 = vmatpush1.msra.mxu0 0.0
        %1617 = vmatprep.subr.mxu0 0.0
        %1618 = vmatpush1.msra.mxu0 0.0
        %1619 = vmatprep.subr.mxu0 0.0
        %1620 = vmatpush1.msra.mxu0 0.0
        %1621 = vmatprep.subr.mxu0 0.0
        %1622 = vmatpush1.msra.mxu0 0.0
        %1623 = vmatprep.subr.mxu0 0.0
        %1624 = vmatpush1.msra.mxu0 0.0
        %1625 = vmatprep.subr.mxu0 0.0
        %1626 = vmatpush1.msra.mxu0 0.0
        %1627 = vmatprep.subr.mxu0 0.0
        %1628 = vmatpush1.msra.mxu0 0.0
        %1629 = vmatprep.subr.mxu0 0.0
        %1630 = vmatpush1.msra.mxu0 0.0
        %1631 = vmatprep.subr.mxu0 0.0
        %1632 = vmatpush1.msra.mxu0 0.0
        %1633 = vmatprep.subr.mxu0 0.0
        %1634 = vmatpush1.msra.mxu0 0.0
        %1635 = vmatprep.subr.mxu0 0.0
        %1636 = vmatpush1.msra.mxu0 0.0
        %1637 = vmatprep.subr.mxu0 0.0
        %1638 = vmatpush1.msra.mxu0 0.0
        %1639 = vmatprep.subr.mxu0 0.0
        %1640 = vmatpush1.msra.mxu0 0.0
        %1641 = vmatprep.subr.mxu0 0.0
        %1642 = vmatpush1.msra.mxu0 0.0
        %1643 = vmatprep.subr.mxu0 0.0
        %1644 = vmatpush1.msra.mxu0 0.0
        %1645 = vmatprep.subr.mxu0 0.0
        %1646 = vmatpush1.msra.mxu0 0.0
        %1647 = vmatprep.subr.mxu0 0.0
        %1648 = vmatpush1.msra.mxu0 0.0
        %1649 = vmatprep.subr.mxu0 0.0
        %1650 = vmatpush1.msra.mxu0 0.0
        %1651 = vmatprep.subr.mxu0 0.0
        %1652 = vmatpush1.msra.mxu0 0.0
        %1653 = vmatprep.subr.mxu0 0.0
        %1654 = vmatpush1.msra.mxu0 0.0
        %1655 = vmatprep.subr.mxu0 0.0
        %1656 = vmatpush1.msra.mxu0 0.0
        %1657 = vmatprep.subr.mxu0 0.0
        %1658 = vmatpush1.msra.mxu0 0.0
        %1659 = vmatprep.subr.mxu0 0.0
        %1660 = vmatpush1.msra.mxu0 0.0
        %1661 = vmatprep.subr.mxu0 0.0
        %1662 = vmatpush1.msra.mxu0 0.0
        %1663 = vmatprep.subr.mxu0 0.0
        %1664 = vmatpush1.msra.mxu0 0.0
        %1665 = vmatprep.subr.mxu0 0.0
        %1666 = vmatpush1.msra.mxu0 0.0
        %1667 = vmatprep.subr.mxu0 0.0
        %1668 = vmatpush1.msra.mxu0 0.0
        %1669 = vmatprep.mubr.f32.mxu0 0.0
        %1670 = vmatmul.mubr.f32.gmra.mrb[0].mxu0 %v1603
        %v1671 = vpop.f32.mrb[0].mxu0
        %v1672 = vadd.f32 %v1600, %v1671
        %v1673 = vpop.f32.mrb[0].mxu0
        %1674 = vdwg.mxu0
        %1675 = vst.msk [vmem:[%s268] sm:$0xff] %vm281, %v1672
        %s1676 = sand.u32 %s141, 1
        %s1677 = scalar_lea.sflag [#allocation4], %s1676
        %s1678 = sand.u32 %s141, 1
        %s1679 = smul.addr %s1678, 8
        %s1680 = scalar_lea.vmem [#allocation8], %s1679
        // Predicated region
        $region53: #{deit_attention.1} parent=39 // pred_check
          %p1681 = pneg %p151
        $region54: #{deit_attention.1} parent=39 // pred_check_branch
          %1683 = sbr.rel (%p1681) target = $region56
        $region55: #{deit_attention.1} parent=39 // pred_region
          %s1685 = ssub.s32 128, 128
          %1686 = vsyncadd %s1677, %s1685
          %s1687 = smul.addr %s23, 128
          %s1688 = scalar_lea.hbm %s5, %s1687
          %s1690 = sshll.u32 %s1680, 4
          %s1691 = int_to_ptr.vmem [resolvable:$true] %s1690
          %1693 = dma.vmem_to_hbm [thread:$0]  %s1691, 128, %s1688, %s1677
        $region56: #{deit_attention.1} parent=39 // pred_fallthru
          _
      $region40: #{deit_attention.1} parent=5 // pred_fallthru
        _
      %p1694 = scmp.le.s32.totalorder 2, %s18
      // Predicated region
      $region57: #{deit_attention.1} parent=5 // pred_check
        %p1695 = pneg %p1694
      $region58: #{deit_attention.1} parent=5 // pred_check_branch
        %1697 = sbr.rel (%p1695) target = $region60
      $region59: #{deit_attention.1} parent=5 // pred_region
        %s1698 = ssub.s32 %s18, 2
        // Predicated region
        $region61: #{deit_attention.1} parent=59 // pred_check
          %p1699 = pneg %p157
        $region62: #{deit_attention.1} parent=59 // pred_check_branch
          %1701 = sbr.rel (%p1699) target = $region64
        $region63: #{deit_attention.1} parent=59 // pred_region
          %s1702 = sand.u32 %s142, 1
          %s1703 = scalar_lea.sflag [#allocation4], %s1702
          %s1704 = sand.u32 %s142, 1
          %s1705 = smul.addr %s1704, 8
          %s1706 = scalar_lea.vmem [#allocation8], %s1705
          %1707 = dma.done %s1703, 128
        $region64: #{deit_attention.1} parent=59 // pred_fallthru
          _
      $region60: #{deit_attention.1} parent=5 // pred_fallthru
        _
    $region6: #{deit_attention.1} parent=1 // loop_footer
      %s22 = sadd.s32 1, %s18
    $region7: #{deit_attention.1} parent=1 // loop_footer_branch
      %17 = sbr.rel target = $region3
    $region8: #{deit_attention.1} parent=1 // loop_exit
      _
    %1708 = vsyncpa [#allocation3], 1
    %s1709 = scalar_lea.sflag [#allocation3], 1
    %1710 = vsyncpa %s1709, 1
    %1711 = vsyncpa [#allocation6], 1
    %1712 = vsyncpa [#allocation4], 1
    %s1713 = scalar_lea.sflag [#allocation4], 1
    %1714 = vsyncpa %s1713, 1

</llo_original>
